<compile_context>
chip_gen: v5e
topology: v5e:2x2
jax: 0.10.0
libtpu: 0.0.40
codegen_flags: <defaults>
</compile_context>

<pallas_src>
import jax
import jax.numpy as jnp
from jax.experimental import pallas as pl
from jax.experimental.pallas import tpu as pltpu


# --------------------------------------------------------------------------
# Fused Pallas kernel (LSTM stack + Linear)
# --------------------------------------------------------------------------
def _make_fused_kernel(T, B, D, H, L, O):
    """Build a fused kernel for fixed static shapes.

    Ref order (all whole-array VMEM refs):
      inputs : x(T, B, D),
               per layer l: wih_l(D_in, 4H), whh_l(H, 4H), b_l(1, 4H),
               w_lin(H, O), b_lin(1, O), h0(L, B, H), c0(L, B, H)
      outputs: y(T*B, O), hN(L, B, H), cN(L, B, H)
    Gate blocks along the 4H axis follow PyTorch order: i, f, g, o.
    """

    def kernel(*refs):
        x_ref = refs[0]
        wih_refs = [refs[1 + 3 * l] for l in range(L)]
        whh_refs = [refs[2 + 3 * l] for l in range(L)]
        b_refs = [refs[3 + 3 * l] for l in range(L)]
        base = 1 + 3 * L
        wlin_ref, blin_ref, h0_ref, c0_ref = refs[base:base + 4]
        y_ref, hN_ref, cN_ref = refs[base + 4:base + 7]

        # Load the (small) packed weights once; they stay resident on-chip.
        wih = [wih_refs[l][...] for l in range(L)]    # (D_in, 4H)
        whh = [whh_refs[l][...] for l in range(L)]    # (H, 4H)
        bias = [b_refs[l][...] for l in range(L)]     # (1, 4H)

        # Recurrent carries (traced values, stay in registers).
        h = [h0_ref[l] for l in range(L)]             # each (B, H)
        c = [c0_ref[l] for l in range(L)]

        outs_last = []
        # TODO(synk): static unroll is fine for small T (<=~16); for long
        # sequences move t onto a lax.fori_loop / grid axis with VMEM carries.
        for t in range(T):                            # fully unrolled
            inp = x_ref[t]                            # (B, D) whole-slab load
            for l in range(L):                        # wavefront over layers
                # One packed 4H-wide matmul per projection.  Only the
                # h-dependent dot is on the serial recurrence chain.
                gz = (jnp.dot(inp, wih[l], preferred_element_type=jnp.float32)
                      + jnp.dot(h[l], whh[l], preferred_element_type=jnp.float32)
                      + bias[l])                      # (B, 4H)
                # Collapsed activations: 1 sigmoid + 1 tanh on the packed
                # tensor (2 EUP pushes), gates via static lane slices.
                sig = jax.nn.sigmoid(gz)
                th = jnp.tanh(gz)
                i_g = sig[:, 0 * H:1 * H]
                f_g = sig[:, 1 * H:2 * H]
                g_g = th[:, 2 * H:3 * H]
                o_g = sig[:, 3 * H:4 * H]
                c[l] = f_g * c[l] + i_g * g_g
                h[l] = o_g * jnp.tanh(c[l])
                inp = h[l]
            outs_last.append(h[L - 1])

        # ---- epilogue: final Linear on stacked hidden states, single store ----
        h_all = jnp.concatenate(outs_last, axis=0)    # (T*B, H), time-major
        y = (jnp.dot(h_all, wlin_ref[...], preferred_element_type=jnp.float32)
             + blin_ref[...])
        y_ref[...] = y.astype(y_ref.dtype)
        for l in range(L):
            hN_ref[l] = h[l].astype(hN_ref.dtype)
            cN_ref[l] = c[l].astype(cN_ref.dtype)

    return kernel


# --------------------------------------------------------------------------
# Wrappers
# --------------------------------------------------------------------------
def prepare_params(params):
    """One-time weight packing: transpose + gate packing + bias fusion.

    Done once (not per forward) so no XLA transpose ops sit on the hot path.
    """
    H = params["hidden_size"]
    L = params["num_layers"]
    packed = {"hidden_size": H, "num_layers": L}
    for l in range(L):
        w_ih = params[f"w_ih_{l}"]                        # (4H, D_in), rows i|f|g|o
        w_hh = params[f"w_hh_{l}"]                        # (4H, H)
        bias = params[f"b_ih_{l}"] + params[f"b_hh_{l}"]  # (4H,)
        packed[f"wih_{l}"] = jnp.transpose(w_ih).astype(jnp.float32)   # (D_in, 4H)
        packed[f"whh_{l}"] = jnp.transpose(w_hh).astype(jnp.float32)   # (H, 4H)
        packed[f"b_{l}"] = bias.reshape(1, 4 * H).astype(jnp.float32)  # (1, 4H)
    packed["w_lin"] = jnp.transpose(params["w_lin"]).astype(jnp.float32)  # (H, O)
    packed["b_lin"] = params["b_lin"].reshape(1, -1).astype(jnp.float32)  # (1, O)
    return packed


def net_forward(x, packed, hidden=None):
    """Mirrors Net.forward: returns (linear_out, (h_n, c_n)).

    x: (B, T, input_size) — batch_first like the PyTorch module.
    linear_out: (B, T, output_size); h_n, c_n: (num_layers, B, hidden_size).
    """
    B, T, D = x.shape
    H = packed["hidden_size"]
    L = packed["num_layers"]
    O = packed["w_lin"].shape[1]
    if hidden is None:
        h0 = jnp.zeros((L, B, H), jnp.float32)
        c0 = jnp.zeros((L, B, H), jnp.float32)
    else:
        h0, c0 = hidden
        h0 = h0.astype(jnp.float32)
        c0 = c0.astype(jnp.float32)

    # time-major (T, B, D): kernel indexes whole (B, D) slabs per step.
    x_tm = jnp.transpose(x, (1, 0, 2)).astype(jnp.float32)

    # Whole-array-resident-in-VMEM specs, no grid -> no double buffering.
    vmem = pl.BlockSpec(memory_space=pltpu.MemorySpace.VMEM)

    inputs = [x_tm]
    for l in range(L):
        inputs += [packed[f"wih_{l}"], packed[f"whh_{l}"], packed[f"b_{l}"]]
    inputs += [packed["w_lin"], packed["b_lin"], h0, c0]

    kernel = _make_fused_kernel(T, B, D, H, L, O)
    y_flat, hN, cN = pl.pallas_call(
        kernel,
        in_specs=[vmem] * len(inputs),
        out_specs=[vmem, vmem, vmem],
        out_shape=(jax.ShapeDtypeStruct((T * B, O), jnp.float32),
                   jax.ShapeDtypeStruct((L, B, H), jnp.float32),
                   jax.ShapeDtypeStruct((L, B, H), jnp.float32)),
    )(*inputs)

    linear_out = jnp.transpose(y_flat.reshape(T, B, O), (1, 0, 2))  # (B, T, O)
    # TODO(synk): PyTorch inter-layer dropout is train-only; eval semantics here.
    return linear_out, (hN, cN)


# --------------------------------------------------------------------------
# Pure-JAX reference (PyTorch LSTM semantics) for validation
# --------------------------------------------------------------------------
def _ref_forward(x, params):
    B, T, _ = x.shape
    H = params["hidden_size"]
    L = params["num_layers"]
    layer_in = x
    hs, cs = [], []
    for l in range(L):
        w_ih, w_hh = params[f"w_ih_{l}"], params[f"w_hh_{l}"]
        b = params[f"b_ih_{l}"] + params[f"b_hh_{l}"]
        h = jnp.zeros((B, H), jnp.float32)
        c = jnp.zeros((B, H), jnp.float32)
        outs = []
        for t in range(T):
            g = layer_in[:, t, :] @ w_ih.T + h @ w_hh.T + b
            i = jax.nn.sigmoid(g[:, 0:H])
            f = jax.nn.sigmoid(g[:, H:2 * H])
            gg = jnp.tanh(g[:, 2 * H:3 * H])
            o = jax.nn.sigmoid(g[:, 3 * H:4 * H])
            c = f * c + i * gg
            h = o * jnp.tanh(c)
            outs.append(h)
        layer_in = jnp.stack(outs, axis=1)
        hs.append(h)
        cs.append(c)
    lin = layer_in @ params["w_lin"].T + params["b_lin"]
    return lin, (jnp.stack(hs), jnp.stack(cs))


# --------------------------------------------------------------------------
# Deterministic parameter init (PyTorch-style uniform(-1/sqrt(H), 1/sqrt(H)))
# --------------------------------------------------------------------------
def init_params(key, input_size, hidden_size, num_layers, output_size):
    k = 1.0 / jnp.sqrt(hidden_size)
    params = {"hidden_size": hidden_size, "num_layers": num_layers}
    for l in range(num_layers):
        d_in = input_size if l == 0 else hidden_size
        key, k1, k2, k3, k4 = jax.random.split(key, 5)
        params[f"w_ih_{l}"] = jax.random.uniform(k1, (4 * hidden_size, d_in),
                                                 jnp.float32, -k, k)
        params[f"w_hh_{l}"] = jax.random.uniform(k2, (4 * hidden_size, hidden_size),
                                                 jnp.float32, -k, k)
        params[f"b_ih_{l}"] = jax.random.uniform(k3, (4 * hidden_size,),
                                                 jnp.float32, -k, k)
        params[f"b_hh_{l}"] = jax.random.uniform(k4, (4 * hidden_size,),
                                                 jnp.float32, -k, k)
    key, k5, k6 = jax.random.split(key, 3)
    params["w_lin"] = jax.random.uniform(k5, (output_size, hidden_size),
                                         jnp.float32, -k, k)
    params["b_lin"] = jax.random.uniform(k6, (output_size,),
                                         jnp.float32, -k, k)
    return params


# --------------------------------------------------------------------------
if __name__ == "__main__":
    # config: input_size=8, hidden_size=32, lstm_layers=2, output_size=4
    B, T = 2, 8
    INPUT_SIZE, HIDDEN_SIZE, LSTM_LAYERS, OUTPUT_SIZE = 8, 32, 2, 4

    root = jax.random.PRNGKey(0)
    k_x, k_p = jax.random.split(root)
    x = jax.random.normal(k_x, (B, T, INPUT_SIZE), jnp.float32)
    params = init_params(k_p, INPUT_SIZE, HIDDEN_SIZE, LSTM_LAYERS, OUTPUT_SIZE)

    packed = prepare_params(params)            # one-time weight packing
    fwd = jax.jit(lambda inp: net_forward(inp, packed))

    linear_out, (h_n, c_n) = fwd(x)
    jax.block_until_ready((linear_out, h_n, c_n))

    # sanity check against pure-JAX reference
    ref_out, (ref_h, ref_c) = _ref_forward(x, params)
    assert linear_out.shape == (B, T, OUTPUT_SIZE)
    assert h_n.shape == (LSTM_LAYERS, B, HIDDEN_SIZE)
    assert c_n.shape == (LSTM_LAYERS, B, HIDDEN_SIZE)
    assert jnp.allclose(linear_out, ref_out, atol=1e-5, rtol=1e-5)
    assert jnp.allclose(h_n, ref_h, atol=1e-5, rtol=1e-5)
    assert jnp.allclose(c_n, ref_c, atol=1e-5, rtol=1e-5)

    print("KERNEL_OK")
</pallas_src>

<mosaic_0001>
module attributes {stable_mosaic.version = 11 : i64} {
  func.func @kernel(%arg0: memref<8x2x8xf32, #tpu.memory_space<vmem>>, %arg1: memref<8x128xf32, #tpu.memory_space<vmem>>, %arg2: memref<32x128xf32, #tpu.memory_space<vmem>>, %arg3: memref<1x128xf32, #tpu.memory_space<vmem>>, %arg4: memref<32x128xf32, #tpu.memory_space<vmem>>, %arg5: memref<32x128xf32, #tpu.memory_space<vmem>>, %arg6: memref<1x128xf32, #tpu.memory_space<vmem>>, %arg7: memref<32x4xf32, #tpu.memory_space<vmem>>, %arg8: memref<1x4xf32, #tpu.memory_space<vmem>>, %arg9: memref<2x2x32xf32, #tpu.memory_space<vmem>>, %arg10: memref<2x2x32xf32, #tpu.memory_space<vmem>>, %arg11: memref<16x4xf32, #tpu.memory_space<vmem>>, %arg12: memref<2x2x32xf32, #tpu.memory_space<vmem>>, %arg13: memref<2x2x32xf32, #tpu.memory_space<vmem>>) attributes {dimension_semantics = [], scalar_prefetch = 0 : i64, scratch_operands = 0 : i64, tpu.core_type = #tpu.core_type<tc>} {
    %c0 = arith.constant 0 : index
    %c0_0 = arith.constant 0 : index
    %0 = vector.load %arg1[%c0, %c0_0] : memref<8x128xf32, #tpu.memory_space<vmem>>, vector<8x128xf32>
    %c0_1 = arith.constant 0 : index
    %c0_2 = arith.constant 0 : index
    %1 = vector.load %arg4[%c0_1, %c0_2] : memref<32x128xf32, #tpu.memory_space<vmem>>, vector<32x128xf32>
    %c0_3 = arith.constant 0 : index
    %c0_4 = arith.constant 0 : index
    %2 = vector.load %arg2[%c0_3, %c0_4] : memref<32x128xf32, #tpu.memory_space<vmem>>, vector<32x128xf32>
    %c0_5 = arith.constant 0 : index
    %c0_6 = arith.constant 0 : index
    %3 = vector.load %arg5[%c0_5, %c0_6] : memref<32x128xf32, #tpu.memory_space<vmem>>, vector<32x128xf32>
    %c0_7 = arith.constant 0 : index
    %c0_8 = arith.constant 0 : index
    %4 = vector.load %arg3[%c0_7, %c0_8] : memref<1x128xf32, #tpu.memory_space<vmem>>, vector<1x128xf32>
    %c0_9 = arith.constant 0 : index
    %c0_10 = arith.constant 0 : index
    %5 = vector.load %arg6[%c0_9, %c0_10] : memref<1x128xf32, #tpu.memory_space<vmem>>, vector<1x128xf32>
    %c0_11 = arith.constant 0 : index
    %c0_12 = arith.constant 0 : index
    %c0_13 = arith.constant 0 : index
    %6 = vector.load %arg9[%c0_11, %c0_12, %c0_13] : memref<2x2x32xf32, #tpu.memory_space<vmem>>, vector<1x2x32xf32>
    %7 = vector.shape_cast %6 : vector<1x2x32xf32> to vector<2x32xf32>
    %c1 = arith.constant 1 : index
    %c0_14 = arith.constant 0 : index
    %c0_15 = arith.constant 0 : index
    %8 = vector.load %arg9[%c1, %c0_14, %c0_15] : memref<2x2x32xf32, #tpu.memory_space<vmem>>, vector<1x2x32xf32>
    %9 = vector.shape_cast %8 : vector<1x2x32xf32> to vector<2x32xf32>
    %c0_16 = arith.constant 0 : index
    %c0_17 = arith.constant 0 : index
    %c0_18 = arith.constant 0 : index
    %10 = vector.load %arg10[%c0_16, %c0_17, %c0_18] : memref<2x2x32xf32, #tpu.memory_space<vmem>>, vector<1x2x32xf32>
    %11 = vector.shape_cast %10 : vector<1x2x32xf32> to vector<2x32xf32>
    %c1_19 = arith.constant 1 : index
    %c0_20 = arith.constant 0 : index
    %c0_21 = arith.constant 0 : index
    %12 = vector.load %arg10[%c1_19, %c0_20, %c0_21] : memref<2x2x32xf32, #tpu.memory_space<vmem>>, vector<1x2x32xf32>
    %13 = vector.shape_cast %12 : vector<1x2x32xf32> to vector<2x32xf32>
    %c0_22 = arith.constant 0 : index
    %c0_23 = arith.constant 0 : index
    %c0_24 = arith.constant 0 : index
    %14 = vector.load %arg0[%c0_22, %c0_23, %c0_24] : memref<8x2x8xf32, #tpu.memory_space<vmem>>, vector<1x2x8xf32>
    %15 = vector.shape_cast %14 : vector<1x2x8xf32> to vector<2x8xf32>
    %cst = arith.constant dense<0.000000e+00> : vector<2x128xf32>
    %16 = tpu.matmul %15, %0, %cst {dimension_numbers = #tpu.dot_dimension_numbers<[1], [0], [0], [1], [0, 0, 1, 1], [], []>} : vector<2x8xf32>, vector<8x128xf32>, vector<2x128xf32> -> vector<2x128xf32>
    %cst_25 = arith.constant dense<0.000000e+00> : vector<2x128xf32>
    %17 = tpu.matmul %7, %2, %cst_25 {dimension_numbers = #tpu.dot_dimension_numbers<[1], [0], [0], [1], [0, 0, 1, 1], [], []>} : vector<2x32xf32>, vector<32x128xf32>, vector<2x128xf32> -> vector<2x128xf32>
    %18 = arith.addf %16, %17 : vector<2x128xf32>
    %19 = vector.broadcast %4 : vector<1x128xf32> to vector<2x128xf32>
    %20 = arith.addf %18, %19 : vector<2x128xf32>
    %21 = arith.negf %20 : vector<2x128xf32>
    %22 = math.exp %21 : vector<2x128xf32>
    %cst_26 = arith.constant 1.000000e+00 : f32
    %23 = vector.broadcast %cst_26 : f32 to vector<2x128xf32>
    %24 = arith.addf %23, %22 : vector<2x128xf32>
    %25 = arith.divf %23, %24 : vector<2x128xf32>
    %26 = math.tanh %20 : vector<2x128xf32>
    %27 = vector.extract_strided_slice %25 {offsets = [0, 0], sizes = [2, 32], strides = [1, 1]} : vector<2x128xf32> to vector<2x32xf32>
    %28 = vector.extract_strided_slice %25 {offsets = [0, 32], sizes = [2, 32], strides = [1, 1]} : vector<2x128xf32> to vector<2x32xf32>
    %29 = vector.extract_strided_slice %26 {offsets = [0, 64], sizes = [2, 32], strides = [1, 1]} : vector<2x128xf32> to vector<2x32xf32>
    %30 = vector.extract_strided_slice %25 {offsets = [0, 96], sizes = [2, 32], strides = [1, 1]} : vector<2x128xf32> to vector<2x32xf32>
    %31 = arith.mulf %28, %11 : vector<2x32xf32>
    %32 = arith.mulf %27, %29 : vector<2x32xf32>
    %33 = arith.addf %31, %32 : vector<2x32xf32>
    %34 = math.tanh %33 : vector<2x32xf32>
    %35 = arith.mulf %30, %34 : vector<2x32xf32>
    %cst_27 = arith.constant dense<0.000000e+00> : vector<2x128xf32>
    %36 = tpu.matmul %35, %1, %cst_27 {dimension_numbers = #tpu.dot_dimension_numbers<[1], [0], [0], [1], [0, 0, 1, 1], [], []>} : vector<2x32xf32>, vector<32x128xf32>, vector<2x128xf32> -> vector<2x128xf32>
    %cst_28 = arith.constant dense<0.000000e+00> : vector<2x128xf32>
    %37 = tpu.matmul %9, %3, %cst_28 {dimension_numbers = #tpu.dot_dimension_numbers<[1], [0], [0], [1], [0, 0, 1, 1], [], []>} : vector<2x32xf32>, vector<32x128xf32>, vector<2x128xf32> -> vector<2x128xf32>
    %38 = arith.addf %36, %37 : vector<2x128xf32>
    %39 = vector.broadcast %5 : vector<1x128xf32> to vector<2x128xf32>
    %40 = arith.addf %38, %39 : vector<2x128xf32>
    %41 = arith.negf %40 : vector<2x128xf32>
    %42 = math.exp %41 : vector<2x128xf32>
    %cst_29 = arith.constant 1.000000e+00 : f32
    %43 = vector.broadcast %cst_29 : f32 to vector<2x128xf32>
    %44 = arith.addf %43, %42 : vector<2x128xf32>
    %45 = arith.divf %43, %44 : vector<2x128xf32>
    %46 = math.tanh %40 : vector<2x128xf32>
    %47 = vector.extract_strided_slice %45 {offsets = [0, 0], sizes = [2, 32], strides = [1, 1]} : vector<2x128xf32> to vector<2x32xf32>
    %48 = vector.extract_strided_slice %45 {offsets = [0, 32], sizes = [2, 32], strides = [1, 1]} : vector<2x128xf32> to vector<2x32xf32>
    %49 = vector.extract_strided_slice %46 {offsets = [0, 64], sizes = [2, 32], strides = [1, 1]} : vector<2x128xf32> to vector<2x32xf32>
    %50 = vector.extract_strided_slice %45 {offsets = [0, 96], sizes = [2, 32], strides = [1, 1]} : vector<2x128xf32> to vector<2x32xf32>
    %51 = arith.mulf %48, %13 : vector<2x32xf32>
    %52 = arith.mulf %47, %49 : vector<2x32xf32>
    %53 = arith.addf %51, %52 : vector<2x32xf32>
    %54 = math.tanh %53 : vector<2x32xf32>
    %55 = arith.mulf %50, %54 : vector<2x32xf32>
    %c1_30 = arith.constant 1 : index
    %c0_31 = arith.constant 0 : index
    %c0_32 = arith.constant 0 : index
    %56 = vector.load %arg0[%c1_30, %c0_31, %c0_32] : memref<8x2x8xf32, #tpu.memory_space<vmem>>, vector<1x2x8xf32>
    %57 = vector.shape_cast %56 : vector<1x2x8xf32> to vector<2x8xf32>
    %cst_33 = arith.constant dense<0.000000e+00> : vector<2x128xf32>
    %58 = tpu.matmul %57, %0, %cst_33 {dimension_numbers = #tpu.dot_dimension_numbers<[1], [0], [0], [1], [0, 0, 1, 1], [], []>} : vector<2x8xf32>, vector<8x128xf32>, vector<2x128xf32> -> vector<2x128xf32>
    %cst_34 = arith.constant dense<0.000000e+00> : vector<2x128xf32>
    %59 = tpu.matmul %35, %2, %cst_34 {dimension_numbers = #tpu.dot_dimension_numbers<[1], [0], [0], [1], [0, 0, 1, 1], [], []>} : vector<2x32xf32>, vector<32x128xf32>, vector<2x128xf32> -> vector<2x128xf32>
    %60 = arith.addf %58, %59 : vector<2x128xf32>
    %61 = vector.broadcast %4 : vector<1x128xf32> to vector<2x128xf32>
    %62 = arith.addf %60, %61 : vector<2x128xf32>
    %63 = arith.negf %62 : vector<2x128xf32>
    %64 = math.exp %63 : vector<2x128xf32>
    %cst_35 = arith.constant 1.000000e+00 : f32
    %65 = vector.broadcast %cst_35 : f32 to vector<2x128xf32>
    %66 = arith.addf %65, %64 : vector<2x128xf32>
    %67 = arith.divf %65, %66 : vector<2x128xf32>
    %68 = math.tanh %62 : vector<2x128xf32>
    %69 = vector.extract_strided_slice %67 {offsets = [0, 0], sizes = [2, 32], strides = [1, 1]} : vector<2x128xf32> to vector<2x32xf32>
    %70 = vector.extract_strided_slice %67 {offsets = [0, 32], sizes = [2, 32], strides = [1, 1]} : vector<2x128xf32> to vector<2x32xf32>
    %71 = vector.extract_strided_slice %68 {offsets = [0, 64], sizes = [2, 32], strides = [1, 1]} : vector<2x128xf32> to vector<2x32xf32>
    %72 = vector.extract_strided_slice %67 {offsets = [0, 96], sizes = [2, 32], strides = [1, 1]} : vector<2x128xf32> to vector<2x32xf32>
    %73 = arith.mulf %70, %33 : vector<2x32xf32>
    %74 = arith.mulf %69, %71 : vector<2x32xf32>
    %75 = arith.addf %73, %74 : vector<2x32xf32>
    %76 = math.tanh %75 : vector<2x32xf32>
    %77 = arith.mulf %72, %76 : vector<2x32xf32>
    %cst_36 = arith.constant dense<0.000000e+00> : vector<2x128xf32>
    %78 = tpu.matmul %77, %1, %cst_36 {dimension_numbers = #tpu.dot_dimension_numbers<[1], [0], [0], [1], [0, 0, 1, 1], [], []>} : vector<2x32xf32>, vector<32x128xf32>, vector<2x128xf32> -> vector<2x128xf32>
    %cst_37 = arith.constant dense<0.000000e+00> : vector<2x128xf32>
    %79 = tpu.matmul %55, %3, %cst_37 {dimension_numbers = #tpu.dot_dimension_numbers<[1], [0], [0], [1], [0, 0, 1, 1], [], []>} : vector<2x32xf32>, vector<32x128xf32>, vector<2x128xf32> -> vector<2x128xf32>
    %80 = arith.addf %78, %79 : vector<2x128xf32>
    %81 = vector.broadcast %5 : vector<1x128xf32> to vector<2x128xf32>
    %82 = arith.addf %80, %81 : vector<2x128xf32>
    %83 = arith.negf %82 : vector<2x128xf32>
    %84 = math.exp %83 : vector<2x128xf32>
    %cst_38 = arith.constant 1.000000e+00 : f32
    %85 = vector.broadcast %cst_38 : f32 to vector<2x128xf32>
    %86 = arith.addf %85, %84 : vector<2x128xf32>
    %87 = arith.divf %85, %86 : vector<2x128xf32>
    %88 = math.tanh %82 : vector<2x128xf32>
    %89 = vector.extract_strided_slice %87 {offsets = [0, 0], sizes = [2, 32], strides = [1, 1]} : vector<2x128xf32> to vector<2x32xf32>
    %90 = vector.extract_strided_slice %87 {offsets = [0, 32], sizes = [2, 32], strides = [1, 1]} : vector<2x128xf32> to vector<2x32xf32>
    %91 = vector.extract_strided_slice %88 {offsets = [0, 64], sizes = [2, 32], strides = [1, 1]} : vector<2x128xf32> to vector<2x32xf32>
    %92 = vector.extract_strided_slice %87 {offsets = [0, 96], sizes = [2, 32], strides = [1, 1]} : vector<2x128xf32> to vector<2x32xf32>
    %93 = arith.mulf %90, %53 : vector<2x32xf32>
    %94 = arith.mulf %89, %91 : vector<2x32xf32>
    %95 = arith.addf %93, %94 : vector<2x32xf32>
    %96 = math.tanh %95 : vector<2x32xf32>
    %97 = arith.mulf %92, %96 : vector<2x32xf32>
    %c2 = arith.constant 2 : index
    %c0_39 = arith.constant 0 : index
    %c0_40 = arith.constant 0 : index
    %98 = vector.load %arg0[%c2, %c0_39, %c0_40] : memref<8x2x8xf32, #tpu.memory_space<vmem>>, vector<1x2x8xf32>
    %99 = vector.shape_cast %98 : vector<1x2x8xf32> to vector<2x8xf32>
    %cst_41 = arith.constant dense<0.000000e+00> : vector<2x128xf32>
    %100 = tpu.matmul %99, %0, %cst_41 {dimension_numbers = #tpu.dot_dimension_numbers<[1], [0], [0], [1], [0, 0, 1, 1], [], []>} : vector<2x8xf32>, vector<8x128xf32>, vector<2x128xf32> -> vector<2x128xf32>
    %cst_42 = arith.constant dense<0.000000e+00> : vector<2x128xf32>
    %101 = tpu.matmul %77, %2, %cst_42 {dimension_numbers = #tpu.dot_dimension_numbers<[1], [0], [0], [1], [0, 0, 1, 1], [], []>} : vector<2x32xf32>, vector<32x128xf32>, vector<2x128xf32> -> vector<2x128xf32>
    %102 = arith.addf %100, %101 : vector<2x128xf32>
    %103 = vector.broadcast %4 : vector<1x128xf32> to vector<2x128xf32>
    %104 = arith.addf %102, %103 : vector<2x128xf32>
    %105 = arith.negf %104 : vector<2x128xf32>
    %106 = math.exp %105 : vector<2x128xf32>
    %cst_43 = arith.constant 1.000000e+00 : f32
    %107 = vector.broadcast %cst_43 : f32 to vector<2x128xf32>
    %108 = arith.addf %107, %106 : vector<2x128xf32>
    %109 = arith.divf %107, %108 : vector<2x128xf32>
    %110 = math.tanh %104 : vector<2x128xf32>
    %111 = vector.extract_strided_slice %109 {offsets = [0, 0], sizes = [2, 32], strides = [1, 1]} : vector<2x128xf32> to vector<2x32xf32>
    %112 = vector.extract_strided_slice %109 {offsets = [0, 32], sizes = [2, 32], strides = [1, 1]} : vector<2x128xf32> to vector<2x32xf32>
    %113 = vector.extract_strided_slice %110 {offsets = [0, 64], sizes = [2, 32], strides = [1, 1]} : vector<2x128xf32> to vector<2x32xf32>
    %114 = vector.extract_strided_slice %109 {offsets = [0, 96], sizes = [2, 32], strides = [1, 1]} : vector<2x128xf32> to vector<2x32xf32>
    %115 = arith.mulf %112, %75 : vector<2x32xf32>
    %116 = arith.mulf %111, %113 : vector<2x32xf32>
    %117 = arith.addf %115, %116 : vector<2x32xf32>
    %118 = math.tanh %117 : vector<2x32xf32>
    %119 = arith.mulf %114, %118 : vector<2x32xf32>
    %cst_44 = arith.constant dense<0.000000e+00> : vector<2x128xf32>
    %120 = tpu.matmul %119, %1, %cst_44 {dimension_numbers = #tpu.dot_dimension_numbers<[1], [0], [0], [1], [0, 0, 1, 1], [], []>} : vector<2x32xf32>, vector<32x128xf32>, vector<2x128xf32> -> vector<2x128xf32>
    %cst_45 = arith.constant dense<0.000000e+00> : vector<2x128xf32>
    %121 = tpu.matmul %97, %3, %cst_45 {dimension_numbers = #tpu.dot_dimension_numbers<[1], [0], [0], [1], [0, 0, 1, 1], [], []>} : vector<2x32xf32>, vector<32x128xf32>, vector<2x128xf32> -> vector<2x128xf32>
    %122 = arith.addf %120, %121 : vector<2x128xf32>
    %123 = vector.broadcast %5 : vector<1x128xf32> to vector<2x128xf32>
    %124 = arith.addf %122, %123 : vector<2x128xf32>
    %125 = arith.negf %124 : vector<2x128xf32>
    %126 = math.exp %125 : vector<2x128xf32>
    %cst_46 = arith.constant 1.000000e+00 : f32
    %127 = vector.broadcast %cst_46 : f32 to vector<2x128xf32>
    %128 = arith.addf %127, %126 : vector<2x128xf32>
    %129 = arith.divf %127, %128 : vector<2x128xf32>
    %130 = math.tanh %124 : vector<2x128xf32>
    %131 = vector.extract_strided_slice %129 {offsets = [0, 0], sizes = [2, 32], strides = [1, 1]} : vector<2x128xf32> to vector<2x32xf32>
    %132 = vector.extract_strided_slice %129 {offsets = [0, 32], sizes = [2, 32], strides = [1, 1]} : vector<2x128xf32> to vector<2x32xf32>
    %133 = vector.extract_strided_slice %130 {offsets = [0, 64], sizes = [2, 32], strides = [1, 1]} : vector<2x128xf32> to vector<2x32xf32>
    %134 = vector.extract_strided_slice %129 {offsets = [0, 96], sizes = [2, 32], strides = [1, 1]} : vector<2x128xf32> to vector<2x32xf32>
    %135 = arith.mulf %132, %95 : vector<2x32xf32>
    %136 = arith.mulf %131, %133 : vector<2x32xf32>
    %137 = arith.addf %135, %136 : vector<2x32xf32>
    %138 = math.tanh %137 : vector<2x32xf32>
    %139 = arith.mulf %134, %138 : vector<2x32xf32>
    %c3 = arith.constant 3 : index
    %c0_47 = arith.constant 0 : index
    %c0_48 = arith.constant 0 : index
    %140 = vector.load %arg0[%c3, %c0_47, %c0_48] : memref<8x2x8xf32, #tpu.memory_space<vmem>>, vector<1x2x8xf32>
    %141 = vector.shape_cast %140 : vector<1x2x8xf32> to vector<2x8xf32>
    %cst_49 = arith.constant dense<0.000000e+00> : vector<2x128xf32>
    %142 = tpu.matmul %141, %0, %cst_49 {dimension_numbers = #tpu.dot_dimension_numbers<[1], [0], [0], [1], [0, 0, 1, 1], [], []>} : vector<2x8xf32>, vector<8x128xf32>, vector<2x128xf32> -> vector<2x128xf32>
    %cst_50 = arith.constant dense<0.000000e+00> : vector<2x128xf32>
    %143 = tpu.matmul %119, %2, %cst_50 {dimension_numbers = #tpu.dot_dimension_numbers<[1], [0], [0], [1], [0, 0, 1, 1], [], []>} : vector<2x32xf32>, vector<32x128xf32>, vector<2x128xf32> -> vector<2x128xf32>
    %144 = arith.addf %142, %143 : vector<2x128xf32>
    %145 = vector.broadcast %4 : vector<1x128xf32> to vector<2x128xf32>
    %146 = arith.addf %144, %145 : vector<2x128xf32>
    %147 = arith.negf %146 : vector<2x128xf32>
    %148 = math.exp %147 : vector<2x128xf32>
    %cst_51 = arith.constant 1.000000e+00 : f32
    %149 = vector.broadcast %cst_51 : f32 to vector<2x128xf32>
    %150 = arith.addf %149, %148 : vector<2x128xf32>
    %151 = arith.divf %149, %150 : vector<2x128xf32>
    %152 = math.tanh %146 : vector<2x128xf32>
    %153 = vector.extract_strided_slice %151 {offsets = [0, 0], sizes = [2, 32], strides = [1, 1]} : vector<2x128xf32> to vector<2x32xf32>
    %154 = vector.extract_strided_slice %151 {offsets = [0, 32], sizes = [2, 32], strides = [1, 1]} : vector<2x128xf32> to vector<2x32xf32>
    %155 = vector.extract_strided_slice %152 {offsets = [0, 64], sizes = [2, 32], strides = [1, 1]} : vector<2x128xf32> to vector<2x32xf32>
    %156 = vector.extract_strided_slice %151 {offsets = [0, 96], sizes = [2, 32], strides = [1, 1]} : vector<2x128xf32> to vector<2x32xf32>
    %157 = arith.mulf %154, %117 : vector<2x32xf32>
    %158 = arith.mulf %153, %155 : vector<2x32xf32>
    %159 = arith.addf %157, %158 : vector<2x32xf32>
    %160 = math.tanh %159 : vector<2x32xf32>
    %161 = arith.mulf %156, %160 : vector<2x32xf32>
    %cst_52 = arith.constant dense<0.000000e+00> : vector<2x128xf32>
    %162 = tpu.matmul %161, %1, %cst_52 {dimension_numbers = #tpu.dot_dimension_numbers<[1], [0], [0], [1], [0, 0, 1, 1], [], []>} : vector<2x32xf32>, vector<32x128xf32>, vector<2x128xf32> -> vector<2x128xf32>
    %cst_53 = arith.constant dense<0.000000e+00> : vector<2x128xf32>
    %163 = tpu.matmul %139, %3, %cst_53 {dimension_numbers = #tpu.dot_dimension_numbers<[1], [0], [0], [1], [0, 0, 1, 1], [], []>} : vector<2x32xf32>, vector<32x128xf32>, vector<2x128xf32> -> vector<2x128xf32>
    %164 = arith.addf %162, %163 : vector<2x128xf32>
    %165 = vector.broadcast %5 : vector<1x128xf32> to vector<2x128xf32>
    %166 = arith.addf %164, %165 : vector<2x128xf32>
    %167 = arith.negf %166 : vector<2x128xf32>
    %168 = math.exp %167 : vector<2x128xf32>
    %cst_54 = arith.constant 1.000000e+00 : f32
    %169 = vector.broadcast %cst_54 : f32 to vector<2x128xf32>
    %170 = arith.addf %169, %168 : vector<2x128xf32>
    %171 = arith.divf %169, %170 : vector<2x128xf32>
    %172 = math.tanh %166 : vector<2x128xf32>
    %173 = vector.extract_strided_slice %171 {offsets = [0, 0], sizes = [2, 32], strides = [1, 1]} : vector<2x128xf32> to vector<2x32xf32>
    %174 = vector.extract_strided_slice %171 {offsets = [0, 32], sizes = [2, 32], strides = [1, 1]} : vector<2x128xf32> to vector<2x32xf32>
    %175 = vector.extract_strided_slice %172 {offsets = [0, 64], sizes = [2, 32], strides = [1, 1]} : vector<2x128xf32> to vector<2x32xf32>
    %176 = vector.extract_strided_slice %171 {offsets = [0, 96], sizes = [2, 32], strides = [1, 1]} : vector<2x128xf32> to vector<2x32xf32>
    %177 = arith.mulf %174, %137 : vector<2x32xf32>
    %178 = arith.mulf %173, %175 : vector<2x32xf32>
    %179 = arith.addf %177, %178 : vector<2x32xf32>
    %180 = math.tanh %179 : vector<2x32xf32>
    %181 = arith.mulf %176, %180 : vector<2x32xf32>
    %c4 = arith.constant 4 : index
    %c0_55 = arith.constant 0 : index
    %c0_56 = arith.constant 0 : index
    %182 = vector.load %arg0[%c4, %c0_55, %c0_56] : memref<8x2x8xf32, #tpu.memory_space<vmem>>, vector<1x2x8xf32>
    %183 = vector.shape_cast %182 : vector<1x2x8xf32> to vector<2x8xf32>
    %cst_57 = arith.constant dense<0.000000e+00> : vector<2x128xf32>
    %184 = tpu.matmul %183, %0, %cst_57 {dimension_numbers = #tpu.dot_dimension_numbers<[1], [0], [0], [1], [0, 0, 1, 1], [], []>} : vector<2x8xf32>, vector<8x128xf32>, vector<2x128xf32> -> vector<2x128xf32>
    %cst_58 = arith.constant dense<0.000000e+00> : vector<2x128xf32>
    %185 = tpu.matmul %161, %2, %cst_58 {dimension_numbers = #tpu.dot_dimension_numbers<[1], [0], [0], [1], [0, 0, 1, 1], [], []>} : vector<2x32xf32>, vector<32x128xf32>, vector<2x128xf32> -> vector<2x128xf32>
    %186 = arith.addf %184, %185 : vector<2x128xf32>
    %187 = vector.broadcast %4 : vector<1x128xf32> to vector<2x128xf32>
    %188 = arith.addf %186, %187 : vector<2x128xf32>
    %189 = arith.negf %188 : vector<2x128xf32>
    %190 = math.exp %189 : vector<2x128xf32>
    %cst_59 = arith.constant 1.000000e+00 : f32
    %191 = vector.broadcast %cst_59 : f32 to vector<2x128xf32>
    %192 = arith.addf %191, %190 : vector<2x128xf32>
    %193 = arith.divf %191, %192 : vector<2x128xf32>
    %194 = math.tanh %188 : vector<2x128xf32>
    %195 = vector.extract_strided_slice %193 {offsets = [0, 0], sizes = [2, 32], strides = [1, 1]} : vector<2x128xf32> to vector<2x32xf32>
    %196 = vector.extract_strided_slice %193 {offsets = [0, 32], sizes = [2, 32], strides = [1, 1]} : vector<2x128xf32> to vector<2x32xf32>
    %197 = vector.extract_strided_slice %194 {offsets = [0, 64], sizes = [2, 32], strides = [1, 1]} : vector<2x128xf32> to vector<2x32xf32>
    %198 = vector.extract_strided_slice %193 {offsets = [0, 96], sizes = [2, 32], strides = [1, 1]} : vector<2x128xf32> to vector<2x32xf32>
    %199 = arith.mulf %196, %159 : vector<2x32xf32>
    %200 = arith.mulf %195, %197 : vector<2x32xf32>
    %201 = arith.addf %199, %200 : vector<2x32xf32>
    %202 = math.tanh %201 : vector<2x32xf32>
    %203 = arith.mulf %198, %202 : vector<2x32xf32>
    %cst_60 = arith.constant dense<0.000000e+00> : vector<2x128xf32>
    %204 = tpu.matmul %203, %1, %cst_60 {dimension_numbers = #tpu.dot_dimension_numbers<[1], [0], [0], [1], [0, 0, 1, 1], [], []>} : vector<2x32xf32>, vector<32x128xf32>, vector<2x128xf32> -> vector<2x128xf32>
    %cst_61 = arith.constant dense<0.000000e+00> : vector<2x128xf32>
    %205 = tpu.matmul %181, %3, %cst_61 {dimension_numbers = #tpu.dot_dimension_numbers<[1], [0], [0], [1], [0, 0, 1, 1], [], []>} : vector<2x32xf32>, vector<32x128xf32>, vector<2x128xf32> -> vector<2x128xf32>
    %206 = arith.addf %204, %205 : vector<2x128xf32>
    %207 = vector.broadcast %5 : vector<1x128xf32> to vector<2x128xf32>
    %208 = arith.addf %206, %207 : vector<2x128xf32>
    %209 = arith.negf %208 : vector<2x128xf32>
    %210 = math.exp %209 : vector<2x128xf32>
    %cst_62 = arith.constant 1.000000e+00 : f32
    %211 = vector.broadcast %cst_62 : f32 to vector<2x128xf32>
    %212 = arith.addf %211, %210 : vector<2x128xf32>
    %213 = arith.divf %211, %212 : vector<2x128xf32>
    %214 = math.tanh %208 : vector<2x128xf32>
    %215 = vector.extract_strided_slice %213 {offsets = [0, 0], sizes = [2, 32], strides = [1, 1]} : vector<2x128xf32> to vector<2x32xf32>
    %216 = vector.extract_strided_slice %213 {offsets = [0, 32], sizes = [2, 32], strides = [1, 1]} : vector<2x128xf32> to vector<2x32xf32>
    %217 = vector.extract_strided_slice %214 {offsets = [0, 64], sizes = [2, 32], strides = [1, 1]} : vector<2x128xf32> to vector<2x32xf32>
    %218 = vector.extract_strided_slice %213 {offsets = [0, 96], sizes = [2, 32], strides = [1, 1]} : vector<2x128xf32> to vector<2x32xf32>
    %219 = arith.mulf %216, %179 : vector<2x32xf32>
    %220 = arith.mulf %215, %217 : vector<2x32xf32>
    %221 = arith.addf %219, %220 : vector<2x32xf32>
    %222 = math.tanh %221 : vector<2x32xf32>
    %223 = arith.mulf %218, %222 : vector<2x32xf32>
    %c5 = arith.constant 5 : index
    %c0_63 = arith.constant 0 : index
    %c0_64 = arith.constant 0 : index
    %224 = vector.load %arg0[%c5, %c0_63, %c0_64] : memref<8x2x8xf32, #tpu.memory_space<vmem>>, vector<1x2x8xf32>
    %225 = vector.shape_cast %224 : vector<1x2x8xf32> to vector<2x8xf32>
    %cst_65 = arith.constant dense<0.000000e+00> : vector<2x128xf32>
    %226 = tpu.matmul %225, %0, %cst_65 {dimension_numbers = #tpu.dot_dimension_numbers<[1], [0], [0], [1], [0, 0, 1, 1], [], []>} : vector<2x8xf32>, vector<8x128xf32>, vector<2x128xf32> -> vector<2x128xf32>
    %cst_66 = arith.constant dense<0.000000e+00> : vector<2x128xf32>
    %227 = tpu.matmul %203, %2, %cst_66 {dimension_numbers = #tpu.dot_dimension_numbers<[1], [0], [0], [1], [0, 0, 1, 1], [], []>} : vector<2x32xf32>, vector<32x128xf32>, vector<2x128xf32> -> vector<2x128xf32>
    %228 = arith.addf %226, %227 : vector<2x128xf32>
    %229 = vector.broadcast %4 : vector<1x128xf32> to vector<2x128xf32>
    %230 = arith.addf %228, %229 : vector<2x128xf32>
    %231 = arith.negf %230 : vector<2x128xf32>
    %232 = math.exp %231 : vector<2x128xf32>
    %cst_67 = arith.constant 1.000000e+00 : f32
    %233 = vector.broadcast %cst_67 : f32 to vector<2x128xf32>
    %234 = arith.addf %233, %232 : vector<2x128xf32>
    %235 = arith.divf %233, %234 : vector<2x128xf32>
    %236 = math.tanh %230 : vector<2x128xf32>
    %237 = vector.extract_strided_slice %235 {offsets = [0, 0], sizes = [2, 32], strides = [1, 1]} : vector<2x128xf32> to vector<2x32xf32>
    %238 = vector.extract_strided_slice %235 {offsets = [0, 32], sizes = [2, 32], strides = [1, 1]} : vector<2x128xf32> to vector<2x32xf32>
    %239 = vector.extract_strided_slice %236 {offsets = [0, 64], sizes = [2, 32], strides = [1, 1]} : vector<2x128xf32> to vector<2x32xf32>
    %240 = vector.extract_strided_slice %235 {offsets = [0, 96], sizes = [2, 32], strides = [1, 1]} : vector<2x128xf32> to vector<2x32xf32>
    %241 = arith.mulf %238, %201 : vector<2x32xf32>
    %242 = arith.mulf %237, %239 : vector<2x32xf32>
    %243 = arith.addf %241, %242 : vector<2x32xf32>
    %244 = math.tanh %243 : vector<2x32xf32>
    %245 = arith.mulf %240, %244 : vector<2x32xf32>
    %cst_68 = arith.constant dense<0.000000e+00> : vector<2x128xf32>
    %246 = tpu.matmul %245, %1, %cst_68 {dimension_numbers = #tpu.dot_dimension_numbers<[1], [0], [0], [1], [0, 0, 1, 1], [], []>} : vector<2x32xf32>, vector<32x128xf32>, vector<2x128xf32> -> vector<2x128xf32>
    %cst_69 = arith.constant dense<0.000000e+00> : vector<2x128xf32>
    %247 = tpu.matmul %223, %3, %cst_69 {dimension_numbers = #tpu.dot_dimension_numbers<[1], [0], [0], [1], [0, 0, 1, 1], [], []>} : vector<2x32xf32>, vector<32x128xf32>, vector<2x128xf32> -> vector<2x128xf32>
    %248 = arith.addf %246, %247 : vector<2x128xf32>
    %249 = vector.broadcast %5 : vector<1x128xf32> to vector<2x128xf32>
    %250 = arith.addf %248, %249 : vector<2x128xf32>
    %251 = arith.negf %250 : vector<2x128xf32>
    %252 = math.exp %251 : vector<2x128xf32>
    %cst_70 = arith.constant 1.000000e+00 : f32
    %253 = vector.broadcast %cst_70 : f32 to vector<2x128xf32>
    %254 = arith.addf %253, %252 : vector<2x128xf32>
    %255 = arith.divf %253, %254 : vector<2x128xf32>
    %256 = math.tanh %250 : vector<2x128xf32>
    %257 = vector.extract_strided_slice %255 {offsets = [0, 0], sizes = [2, 32], strides = [1, 1]} : vector<2x128xf32> to vector<2x32xf32>
    %258 = vector.extract_strided_slice %255 {offsets = [0, 32], sizes = [2, 32], strides = [1, 1]} : vector<2x128xf32> to vector<2x32xf32>
    %259 = vector.extract_strided_slice %256 {offsets = [0, 64], sizes = [2, 32], strides = [1, 1]} : vector<2x128xf32> to vector<2x32xf32>
    %260 = vector.extract_strided_slice %255 {offsets = [0, 96], sizes = [2, 32], strides = [1, 1]} : vector<2x128xf32> to vector<2x32xf32>
    %261 = arith.mulf %258, %221 : vector<2x32xf32>
    %262 = arith.mulf %257, %259 : vector<2x32xf32>
    %263 = arith.addf %261, %262 : vector<2x32xf32>
    %264 = math.tanh %263 : vector<2x32xf32>
    %265 = arith.mulf %260, %264 : vector<2x32xf32>
    %c6 = arith.constant 6 : index
    %c0_71 = arith.constant 0 : index
    %c0_72 = arith.constant 0 : index
    %266 = vector.load %arg0[%c6, %c0_71, %c0_72] : memref<8x2x8xf32, #tpu.memory_space<vmem>>, vector<1x2x8xf32>
    %267 = vector.shape_cast %266 : vector<1x2x8xf32> to vector<2x8xf32>
    %cst_73 = arith.constant dense<0.000000e+00> : vector<2x128xf32>
    %268 = tpu.matmul %267, %0, %cst_73 {dimension_numbers = #tpu.dot_dimension_numbers<[1], [0], [0], [1], [0, 0, 1, 1], [], []>} : vector<2x8xf32>, vector<8x128xf32>, vector<2x128xf32> -> vector<2x128xf32>
    %cst_74 = arith.constant dense<0.000000e+00> : vector<2x128xf32>
    %269 = tpu.matmul %245, %2, %cst_74 {dimension_numbers = #tpu.dot_dimension_numbers<[1], [0], [0], [1], [0, 0, 1, 1], [], []>} : vector<2x32xf32>, vector<32x128xf32>, vector<2x128xf32> -> vector<2x128xf32>
    %270 = arith.addf %268, %269 : vector<2x128xf32>
    %271 = vector.broadcast %4 : vector<1x128xf32> to vector<2x128xf32>
    %272 = arith.addf %270, %271 : vector<2x128xf32>
    %273 = arith.negf %272 : vector<2x128xf32>
    %274 = math.exp %273 : vector<2x128xf32>
    %cst_75 = arith.constant 1.000000e+00 : f32
    %275 = vector.broadcast %cst_75 : f32 to vector<2x128xf32>
    %276 = arith.addf %275, %274 : vector<2x128xf32>
    %277 = arith.divf %275, %276 : vector<2x128xf32>
    %278 = math.tanh %272 : vector<2x128xf32>
    %279 = vector.extract_strided_slice %277 {offsets = [0, 0], sizes = [2, 32], strides = [1, 1]} : vector<2x128xf32> to vector<2x32xf32>
    %280 = vector.extract_strided_slice %277 {offsets = [0, 32], sizes = [2, 32], strides = [1, 1]} : vector<2x128xf32> to vector<2x32xf32>
    %281 = vector.extract_strided_slice %278 {offsets = [0, 64], sizes = [2, 32], strides = [1, 1]} : vector<2x128xf32> to vector<2x32xf32>
    %282 = vector.extract_strided_slice %277 {offsets = [0, 96], sizes = [2, 32], strides = [1, 1]} : vector<2x128xf32> to vector<2x32xf32>
    %283 = arith.mulf %280, %243 : vector<2x32xf32>
    %284 = arith.mulf %279, %281 : vector<2x32xf32>
    %285 = arith.addf %283, %284 : vector<2x32xf32>
    %286 = math.tanh %285 : vector<2x32xf32>
    %287 = arith.mulf %282, %286 : vector<2x32xf32>
    %cst_76 = arith.constant dense<0.000000e+00> : vector<2x128xf32>
    %288 = tpu.matmul %287, %1, %cst_76 {dimension_numbers = #tpu.dot_dimension_numbers<[1], [0], [0], [1], [0, 0, 1, 1], [], []>} : vector<2x32xf32>, vector<32x128xf32>, vector<2x128xf32> -> vector<2x128xf32>
    %cst_77 = arith.constant dense<0.000000e+00> : vector<2x128xf32>
    %289 = tpu.matmul %265, %3, %cst_77 {dimension_numbers = #tpu.dot_dimension_numbers<[1], [0], [0], [1], [0, 0, 1, 1], [], []>} : vector<2x32xf32>, vector<32x128xf32>, vector<2x128xf32> -> vector<2x128xf32>
    %290 = arith.addf %288, %289 : vector<2x128xf32>
    %291 = vector.broadcast %5 : vector<1x128xf32> to vector<2x128xf32>
    %292 = arith.addf %290, %291 : vector<2x128xf32>
    %293 = arith.negf %292 : vector<2x128xf32>
    %294 = math.exp %293 : vector<2x128xf32>
    %cst_78 = arith.constant 1.000000e+00 : f32
    %295 = vector.broadcast %cst_78 : f32 to vector<2x128xf32>
    %296 = arith.addf %295, %294 : vector<2x128xf32>
    %297 = arith.divf %295, %296 : vector<2x128xf32>
    %298 = math.tanh %292 : vector<2x128xf32>
    %299 = vector.extract_strided_slice %297 {offsets = [0, 0], sizes = [2, 32], strides = [1, 1]} : vector<2x128xf32> to vector<2x32xf32>
    %300 = vector.extract_strided_slice %297 {offsets = [0, 32], sizes = [2, 32], strides = [1, 1]} : vector<2x128xf32> to vector<2x32xf32>
    %301 = vector.extract_strided_slice %298 {offsets = [0, 64], sizes = [2, 32], strides = [1, 1]} : vector<2x128xf32> to vector<2x32xf32>
    %302 = vector.extract_strided_slice %297 {offsets = [0, 96], sizes = [2, 32], strides = [1, 1]} : vector<2x128xf32> to vector<2x32xf32>
    %303 = arith.mulf %300, %263 : vector<2x32xf32>
    %304 = arith.mulf %299, %301 : vector<2x32xf32>
    %305 = arith.addf %303, %304 : vector<2x32xf32>
    %306 = math.tanh %305 : vector<2x32xf32>
    %307 = arith.mulf %302, %306 : vector<2x32xf32>
    %c7 = arith.constant 7 : index
    %c0_79 = arith.constant 0 : index
    %c0_80 = arith.constant 0 : index
    %308 = vector.load %arg0[%c7, %c0_79, %c0_80] : memref<8x2x8xf32, #tpu.memory_space<vmem>>, vector<1x2x8xf32>
    %309 = vector.shape_cast %308 : vector<1x2x8xf32> to vector<2x8xf32>
    %cst_81 = arith.constant dense<0.000000e+00> : vector<2x128xf32>
    %310 = tpu.matmul %309, %0, %cst_81 {dimension_numbers = #tpu.dot_dimension_numbers<[1], [0], [0], [1], [0, 0, 1, 1], [], []>} : vector<2x8xf32>, vector<8x128xf32>, vector<2x128xf32> -> vector<2x128xf32>
    %cst_82 = arith.constant dense<0.000000e+00> : vector<2x128xf32>
    %311 = tpu.matmul %287, %2, %cst_82 {dimension_numbers = #tpu.dot_dimension_numbers<[1], [0], [0], [1], [0, 0, 1, 1], [], []>} : vector<2x32xf32>, vector<32x128xf32>, vector<2x128xf32> -> vector<2x128xf32>
    %312 = arith.addf %310, %311 : vector<2x128xf32>
    %313 = vector.broadcast %4 : vector<1x128xf32> to vector<2x128xf32>
    %314 = arith.addf %312, %313 : vector<2x128xf32>
    %315 = arith.negf %314 : vector<2x128xf32>
    %316 = math.exp %315 : vector<2x128xf32>
    %cst_83 = arith.constant 1.000000e+00 : f32
    %317 = vector.broadcast %cst_83 : f32 to vector<2x128xf32>
    %318 = arith.addf %317, %316 : vector<2x128xf32>
    %319 = arith.divf %317, %318 : vector<2x128xf32>
    %320 = math.tanh %314 : vector<2x128xf32>
    %321 = vector.extract_strided_slice %319 {offsets = [0, 0], sizes = [2, 32], strides = [1, 1]} : vector<2x128xf32> to vector<2x32xf32>
    %322 = vector.extract_strided_slice %319 {offsets = [0, 32], sizes = [2, 32], strides = [1, 1]} : vector<2x128xf32> to vector<2x32xf32>
    %323 = vector.extract_strided_slice %320 {offsets = [0, 64], sizes = [2, 32], strides = [1, 1]} : vector<2x128xf32> to vector<2x32xf32>
    %324 = vector.extract_strided_slice %319 {offsets = [0, 96], sizes = [2, 32], strides = [1, 1]} : vector<2x128xf32> to vector<2x32xf32>
    %325 = arith.mulf %322, %285 : vector<2x32xf32>
    %326 = arith.mulf %321, %323 : vector<2x32xf32>
    %327 = arith.addf %325, %326 : vector<2x32xf32>
    %328 = math.tanh %327 : vector<2x32xf32>
    %329 = arith.mulf %324, %328 : vector<2x32xf32>
    %cst_84 = arith.constant dense<0.000000e+00> : vector<2x128xf32>
    %330 = tpu.matmul %329, %1, %cst_84 {dimension_numbers = #tpu.dot_dimension_numbers<[1], [0], [0], [1], [0, 0, 1, 1], [], []>} : vector<2x32xf32>, vector<32x128xf32>, vector<2x128xf32> -> vector<2x128xf32>
    %cst_85 = arith.constant dense<0.000000e+00> : vector<2x128xf32>
    %331 = tpu.matmul %307, %3, %cst_85 {dimension_numbers = #tpu.dot_dimension_numbers<[1], [0], [0], [1], [0, 0, 1, 1], [], []>} : vector<2x32xf32>, vector<32x128xf32>, vector<2x128xf32> -> vector<2x128xf32>
    %332 = arith.addf %330, %331 : vector<2x128xf32>
    %333 = vector.broadcast %5 : vector<1x128xf32> to vector<2x128xf32>
    %334 = arith.addf %332, %333 : vector<2x128xf32>
    %335 = arith.negf %334 : vector<2x128xf32>
    %336 = math.exp %335 : vector<2x128xf32>
    %cst_86 = arith.constant 1.000000e+00 : f32
    %337 = vector.broadcast %cst_86 : f32 to vector<2x128xf32>
    %338 = arith.addf %337, %336 : vector<2x128xf32>
    %339 = arith.divf %337, %338 : vector<2x128xf32>
    %340 = math.tanh %334 : vector<2x128xf32>
    %341 = vector.extract_strided_slice %339 {offsets = [0, 0], sizes = [2, 32], strides = [1, 1]} : vector<2x128xf32> to vector<2x32xf32>
    %342 = vector.extract_strided_slice %339 {offsets = [0, 32], sizes = [2, 32], strides = [1, 1]} : vector<2x128xf32> to vector<2x32xf32>
    %343 = vector.extract_strided_slice %340 {offsets = [0, 64], sizes = [2, 32], strides = [1, 1]} : vector<2x128xf32> to vector<2x32xf32>
    %344 = vector.extract_strided_slice %339 {offsets = [0, 96], sizes = [2, 32], strides = [1, 1]} : vector<2x128xf32> to vector<2x32xf32>
    %345 = arith.mulf %342, %305 : vector<2x32xf32>
    %346 = arith.mulf %341, %343 : vector<2x32xf32>
    %347 = arith.addf %345, %346 : vector<2x32xf32>
    %348 = math.tanh %347 : vector<2x32xf32>
    %349 = arith.mulf %344, %348 : vector<2x32xf32>
    %350 = tpu.concatenate %55, %97, %139, %181, %223, %265, %307, %349 in 0 : vector<2x32xf32>, vector<2x32xf32>, vector<2x32xf32>, vector<2x32xf32>, vector<2x32xf32>, vector<2x32xf32>, vector<2x32xf32>, vector<2x32xf32> -> vector<16x32xf32>
    %c0_87 = arith.constant 0 : index
    %c0_88 = arith.constant 0 : index
    %351 = vector.load %arg7[%c0_87, %c0_88] : memref<32x4xf32, #tpu.memory_space<vmem>>, vector<32x4xf32>
    %cst_89 = arith.constant dense<0.000000e+00> : vector<16x4xf32>
    %352 = tpu.matmul %350, %351, %cst_89 {dimension_numbers = #tpu.dot_dimension_numbers<[1], [0], [0], [1], [0, 0, 1, 1], [], []>} : vector<16x32xf32>, vector<32x4xf32>, vector<16x4xf32> -> vector<16x4xf32>
    %c0_90 = arith.constant 0 : index
    %c0_91 = arith.constant 0 : index
    %353 = vector.load %arg8[%c0_90, %c0_91] : memref<1x4xf32, #tpu.memory_space<vmem>>, vector<1x4xf32>
    %354 = vector.broadcast %353 : vector<1x4xf32> to vector<16x4xf32>
    %355 = arith.addf %352, %354 : vector<16x4xf32>
    %c0_92 = arith.constant 0 : index
    %c0_93 = arith.constant 0 : index
    %356 = vector.load %arg11[%c0_92, %c0_93] : memref<16x4xf32, #tpu.memory_space<vmem>>, vector<16x4xf32>
    tpu.vector_store %arg11[%c0_92, %c0_93], %355 {strides = array<i32>} : memref<16x4xf32, #tpu.memory_space<vmem>>, vector<16x4xf32>,
    %c0_94 = arith.constant 0 : index
    %c0_95 = arith.constant 0 : index
    %c0_96 = arith.constant 0 : index
    %357 = vector.load %arg12[%c0_94, %c0_95, %c0_96] : memref<2x2x32xf32, #tpu.memory_space<vmem>>, vector<1x2x32xf32>
    %358 = vector.shape_cast %357 : vector<1x2x32xf32> to vector<2x32xf32>
    %359 = vector.shape_cast %329 : vector<2x32xf32> to vector<1x2x32xf32>
    tpu.vector_store %arg12[%c0_94, %c0_95, %c0_96], %359 {strides = array<i32>} : memref<2x2x32xf32, #tpu.memory_space<vmem>>, vector<1x2x32xf32>,
    %c0_97 = arith.constant 0 : index
    %c0_98 = arith.constant 0 : index
    %c0_99 = arith.constant 0 : index
    %360 = vector.load %arg13[%c0_97, %c0_98, %c0_99] : memref<2x2x32xf32, #tpu.memory_space<vmem>>, vector<1x2x32xf32>
    %361 = vector.shape_cast %360 : vector<1x2x32xf32> to vector<2x32xf32>
    %362 = vector.shape_cast %327 : vector<2x32xf32> to vector<1x2x32xf32>
    tpu.vector_store %arg13[%c0_97, %c0_98, %c0_99], %362 {strides = array<i32>} : memref<2x2x32xf32, #tpu.memory_space<vmem>>, vector<1x2x32xf32>,
    %c1_100 = arith.constant 1 : index
    %c0_101 = arith.constant 0 : index
    %c0_102 = arith.constant 0 : index
    %363 = vector.load %arg12[%c1_100, %c0_101, %c0_102] : memref<2x2x32xf32, #tpu.memory_space<vmem>>, vector<1x2x32xf32>
    %364 = vector.shape_cast %363 : vector<1x2x32xf32> to vector<2x32xf32>
    %365 = vector.shape_cast %349 : vector<2x32xf32> to vector<1x2x32xf32>
    tpu.vector_store %arg12[%c1_100, %c0_101, %c0_102], %365 {strides = array<i32>} : memref<2x2x32xf32, #tpu.memory_space<vmem>>, vector<1x2x32xf32>,
    %c1_103 = arith.constant 1 : index
    %c0_104 = arith.constant 0 : index
    %c0_105 = arith.constant 0 : index
    %366 = vector.load %arg13[%c1_103, %c0_104, %c0_105] : memref<2x2x32xf32, #tpu.memory_space<vmem>>, vector<1x2x32xf32>
    %367 = vector.shape_cast %366 : vector<1x2x32xf32> to vector<2x32xf32>
    %368 = vector.shape_cast %347 : vector<2x32xf32> to vector<1x2x32xf32>
    tpu.vector_store %arg13[%c1_103, %c0_104, %c0_105], %368 {strides = array<i32>} : memref<2x2x32xf32, #tpu.memory_space<vmem>>, vector<1x2x32xf32>,
    return
  }
}

</mosaic_0001>

<llo_original>
// kernel: _lambda_.1
$region0: #{_lambda_.1}
  #allocation0 [shape = 'u32[]', space=smem, size = 0x4, offset = 0x4, fixed_abs, tag = 'smem constant byte address 0x4 - core index']
  #allocation1 [shape = 'u32[72,128]{1,0:T(1,128)}', space=vmem, size = 0x9000, scoped, tag = 'internal scratch']
  %s0 = inlined_call_operand.vmem [shape: f32[8,2,8], index: 0, kind: input, shape index: {}]
  %s1 = inlined_call_operand.vmem [shape: f32[8,128], index: 1, kind: input, shape index: {}]
  %s2 = inlined_call_operand.hbm [shape: f32[32,128], index: 2, kind: input, shape index: {}]
  %s3 = inlined_call_operand.vmem [shape: f32[1,128], index: 3, kind: input, shape index: {}]
  %s4 = inlined_call_operand.hbm [shape: f32[32,128], index: 4, kind: input, shape index: {}]
  %s5 = inlined_call_operand.hbm [shape: f32[32,128], index: 5, kind: input, shape index: {}]
  %s6 = inlined_call_operand.vmem [shape: f32[1,128], index: 6, kind: input, shape index: {}]
  %s7 = inlined_call_operand.vmem [shape: f32[32,4], index: 7, kind: input, shape index: {}]
  %s8 = inlined_call_operand.vmem [shape: f32[1,4], index: 8, kind: input, shape index: {}]
  %s9 = inlined_call_operand.vmem [shape: f32[2,2,32], index: 9, kind: input, shape index: {}, may-alias: {9,10}]
  %s10 = inlined_call_operand.vmem [shape: f32[2,2,32], index: 10, kind: input, shape index: {}, may-alias: {9,10}]
  %s11 = inlined_call_operand.vmem [shape: f32[16,4], index: 11, kind: output, shape index: {0}]
  %s12 = inlined_call_operand.hbm [shape: f32[2,2,32], index: 12, kind: output, shape index: {1}]
  %s13 = inlined_call_operand.hbm [shape: f32[2,2,32], index: 13, kind: output, shape index: {2}]
  %14 = xla_tuple %s11, %s12, %s13
  %s15 = sld [smem:[#allocation0]]
  $region82: #{_lambda_.1} parent=0
    _
  %s17 = ssub.s32 1, %s15
  %s18 = scalar_select 0, %s17, %s15
  $region1: #{_lambda_.1} parent=0
    #allocation2 [shape = 'u8[16384]{0}', space=vmem, size = 0x4000, scoped, tag = 'input window, operand 2, single buffered']
    #allocation3 [shape = 's32[1]{0}', space=sflag, size = 0x4, scoped, tag = 'scoped memory for _lambda_.1']
    #allocation4 [shape = 's32[1]{0}', space=sflag, size = 0x4, scoped, tag = 'scoped memory for _lambda_.1']
    #allocation5 [shape = 'u8[16384]{0}', space=vmem, size = 0x4000, scoped, tag = 'input window, operand 4, single buffered']
    #allocation6 [shape = 's32[1]{0}', space=sflag, size = 0x4, scoped, tag = 'scoped memory for _lambda_.1']
    #allocation7 [shape = 'u8[16384]{0}', space=vmem, size = 0x4000, scoped, tag = 'input window, operand 5, single buffered']
    #allocation8 [shape = 'u8[2048]{0}', space=vmem, size = 0x800, scoped, tag = 'output window, operand 1, single buffered']
    #allocation9 [shape = 'u8[2048]{0}', space=vmem, size = 0x800, scoped, tag = 'output window, operand 2, single buffered']
    #allocation10 [shape = 's32[1]{0}', space=sflag, size = 0x4, scoped, tag = 'scoped memory for _lambda_.1']
    %19 = vsyncpa [#allocation3], 0
    %20 = vsyncpa [#allocation6], 0
    %21 = vsyncpa [#allocation4], 0
    %22 = vsyncpa [#allocation10], 0
    // Predicated region
    $region2: #{_lambda_.1} parent=1 // pred_check
      _
    $region3: #{_lambda_.1} parent=1 // pred_check_branch
      %24 = sbr.rel (0) target = $region5
    $region4: #{_lambda_.1} parent=1 // pred_region
      _
    $region5: #{_lambda_.1} parent=1 // pred_fallthru
      _
    // Predicated region
    $region6: #{_lambda_.1} parent=1 // pred_check
      _
    $region7: #{_lambda_.1} parent=1 // pred_check_branch
      %26 = sbr.rel (0) target = $region9
    $region8: #{_lambda_.1} parent=1 // pred_region
      _
    $region9: #{_lambda_.1} parent=1 // pred_fallthru
      _
    // Predicated region
    $region10: #{_lambda_.1} parent=1 // pred_check
      _
    $region11: #{_lambda_.1} parent=1 // pred_check_branch
      %28 = sbr.rel (0) target = $region13
    $region12: #{_lambda_.1} parent=1 // pred_region
      %30 = vsyncadd [#allocation3], 0
      %s31 = sshll.u32 %s2, 4
      %s32 = int_to_ptr.hbm [resolvable:$true] %s31
      %s33 = sshll.u32 [#allocation2], 4
      %s34 = int_to_ptr.vmem [resolvable:$true] %s33
      %39 = dma.hbm_to_vmem [thread:$0]  %s32, 512, %s34, [#allocation3], 128, 128, 8
    $region13: #{_lambda_.1} parent=1 // pred_fallthru
      _
    // Predicated region
    $region14: #{_lambda_.1} parent=1 // pred_check
      _
    $region15: #{_lambda_.1} parent=1 // pred_check_branch
      %41 = sbr.rel (0) target = $region17
    $region16: #{_lambda_.1} parent=1 // pred_region
      _
    $region17: #{_lambda_.1} parent=1 // pred_fallthru
      _
    // Predicated region
    $region18: #{_lambda_.1} parent=1 // pred_check
      _
    $region19: #{_lambda_.1} parent=1 // pred_check_branch
      %43 = sbr.rel (0) target = $region21
    $region20: #{_lambda_.1} parent=1 // pred_region
      %45 = vsyncadd [#allocation6], 0
      %s46 = sshll.u32 %s4, 4
      %s47 = int_to_ptr.hbm [resolvable:$true] %s46
      %s48 = sshll.u32 [#allocation5], 4
      %s49 = int_to_ptr.vmem [resolvable:$true] %s48
      %54 = dma.hbm_to_vmem [thread:$0]  %s47, 512, %s49, [#allocation6], 128, 128, 8
    $region21: #{_lambda_.1} parent=1 // pred_fallthru
      _
    // Predicated region
    $region22: #{_lambda_.1} parent=1 // pred_check
      _
    $region23: #{_lambda_.1} parent=1 // pred_check_branch
      %56 = sbr.rel (0) target = $region25
    $region24: #{_lambda_.1} parent=1 // pred_region
      %58 = vsyncadd [#allocation6], 0
      %s59 = sshll.u32 %s5, 4
      %s60 = int_to_ptr.hbm [resolvable:$true] %s59
      %s61 = sshll.u32 [#allocation7], 4
      %s62 = int_to_ptr.vmem [resolvable:$true] %s61
      %67 = dma.hbm_to_vmem [thread:$0]  %s60, 512, %s62, [#allocation6], 128, 128, 8
    $region25: #{_lambda_.1} parent=1 // pred_fallthru
      _
    // Predicated region
    $region26: #{_lambda_.1} parent=1 // pred_check
      _
    $region27: #{_lambda_.1} parent=1 // pred_check_branch
      %69 = sbr.rel (0) target = $region29
    $region28: #{_lambda_.1} parent=1 // pred_region
      _
    $region29: #{_lambda_.1} parent=1 // pred_fallthru
      _
    // Predicated region
    $region30: #{_lambda_.1} parent=1 // pred_check
      _
    $region31: #{_lambda_.1} parent=1 // pred_check_branch
      %71 = sbr.rel (0) target = $region33
    $region32: #{_lambda_.1} parent=1 // pred_region
      _
    $region33: #{_lambda_.1} parent=1 // pred_fallthru
      _
    // Predicated region
    $region34: #{_lambda_.1} parent=1 // pred_check
      _
    $region35: #{_lambda_.1} parent=1 // pred_check_branch
      %73 = sbr.rel (0) target = $region37
    $region36: #{_lambda_.1} parent=1 // pred_region
      _
    $region37: #{_lambda_.1} parent=1 // pred_fallthru
      _
    // Predicated region
    $region38: #{_lambda_.1} parent=1 // pred_check
      _
    $region39: #{_lambda_.1} parent=1 // pred_check_branch
      %75 = sbr.rel (0) target = $region41
    $region40: #{_lambda_.1} parent=1 // pred_region
      _
    $region41: #{_lambda_.1} parent=1 // pred_fallthru
      _
    // Predicated region
    $region42: #{_lambda_.1} parent=1 // pred_check
      _
    $region43: #{_lambda_.1} parent=1 // pred_check_branch
      %77 = sbr.rel (0) target = $region45
    $region44: #{_lambda_.1} parent=1 // pred_region
      _
    $region45: #{_lambda_.1} parent=1 // pred_fallthru
      _
    // Predicated region
    $region46: #{_lambda_.1} parent=1 // pred_check
      _
    $region47: #{_lambda_.1} parent=1 // pred_check_branch
      %79 = sbr.rel (0) target = $region49
    $region48: #{_lambda_.1} parent=1 // pred_region
      %81 = dma.done [#allocation3], 512
    $region49: #{_lambda_.1} parent=1 // pred_fallthru
      _
    // Predicated region
    $region50: #{_lambda_.1} parent=1 // pred_check
      _
    $region51: #{_lambda_.1} parent=1 // pred_check_branch
      %83 = sbr.rel (0) target = $region53
    $region52: #{_lambda_.1} parent=1 // pred_region
      %85 = dma.done [#allocation6], 512
    $region53: #{_lambda_.1} parent=1 // pred_fallthru
      _
    // Predicated region
    $region54: #{_lambda_.1} parent=1 // pred_check
      _
    $region55: #{_lambda_.1} parent=1 // pred_check_branch
      %87 = sbr.rel (0) target = $region57
    $region56: #{_lambda_.1} parent=1 // pred_region
      %89 = dma.done [#allocation6], 512
    $region57: #{_lambda_.1} parent=1 // pred_fallthru
      _
    %v90 = vld [vmem:[%s1] sm:$0xff]
    %v91 = vld [vmem:[#allocation5] sm:$0xff]
    %v92 = vld [vmem:[#allocation5 + $0x8] sm:$0xff]
    %v93 = vld [vmem:[#allocation5 + $0x10] sm:$0xff]
    %v94 = vld [vmem:[#allocation5 + $0x18] sm:$0xff]
    %v95 = vld [vmem:[#allocation2] sm:$0xff]
    %v96 = vld [vmem:[#allocation2 + $0x8] sm:$0xff]
    %v97 = vld [vmem:[#allocation2 + $0x10] sm:$0xff]
    %v98 = vld [vmem:[#allocation2 + $0x18] sm:$0xff]
    %v99 = vld [vmem:[#allocation7] sm:$0xff]
    %v100 = vld [vmem:[#allocation7 + $0x8] sm:$0xff]
    %v101 = vld [vmem:[#allocation7 + $0x10] sm:$0xff]
    %v102 = vld [vmem:[#allocation7 + $0x18] sm:$0xff]
    %v103 = vld [vmem:[%s3] sm:$0x1]
    %v104 = vld [vmem:[%s6] sm:$0x1]
    %v105 = vld [vmem:[%s9] sm:$0x3]
    %s106 = scalar_lea.vmem %s9, 2
    %v107 = vld [vmem:[%s106] sm:$0x3]
    %v108 = vld [vmem:[%s10] sm:$0x3]
    %s109 = scalar_lea.vmem %s10, 2
    %v110 = vld [vmem:[%s109] sm:$0x3]
    %v111 = vld [vmem:[%s0] sm:$0x3]
    %vm112 = vcmask 261120
    %v114 = vsel %vm112, %v105, 0
    %116 = vmatpush.msra.mxu0 0.0
    %117 = vmatpush.msra.mxu0 0.0
    %118 = vmatpush.msra.mxu0 0.0
    %119 = vmatpush.msra.mxu0 0.0
    %120 = vmatpush.msra.mxu0 0.0
    %121 = vmatpush.msra.mxu0 0.0
    %122 = vmatpush.msra.mxu0 0.0
    %123 = vmatpush.msra.mxu0 0.0
    %124 = vmatpush.msra.mxu0 0.0
    %125 = vmatpush.msra.mxu0 0.0
    %126 = vmatpush.msra.mxu0 0.0
    %127 = vmatpush.msra.mxu0 0.0
    %128 = vmatpush.msra.mxu0 %v98
    %129 = vmatpush.msra.mxu0 %v97
    %130 = vmatpush.msra.mxu0 %v96
    %131 = vmatpush.msra.mxu0 %v95
    %132 = vmatmul.f32.gmra.mxu0 %v114
    %v133 = vpop.f32.mrf.mxu0
    %v134 = vadd.f32 0.0, %v133
    %135 = vdwg.mxu0
    %vm136 = vcmask 64512
    %v138 = vsel %vm136, %v111, 0
    %140 = vmatpush.msra.mxu0 0.0
    %141 = vmatpush.msra.mxu0 0.0
    %142 = vmatpush.msra.mxu0 0.0
    %143 = vmatpush.msra.mxu0 0.0
    %144 = vmatpush.msra.mxu0 0.0
    %145 = vmatpush.msra.mxu0 0.0
    %146 = vmatpush.msra.mxu0 0.0
    %147 = vmatpush.msra.mxu0 0.0
    %148 = vmatpush.msra.mxu0 0.0
    %149 = vmatpush.msra.mxu0 0.0
    %150 = vmatpush.msra.mxu0 0.0
    %151 = vmatpush.msra.mxu0 0.0
    %152 = vmatpush.msra.mxu0 0.0
    %153 = vmatpush.msra.mxu0 0.0
    %154 = vmatpush.msra.mxu0 0.0
    %155 = vmatpush.msra.mxu0 %v90
    %156 = vmatmul.f32.gmra.mxu0 %v138
    %v157 = vpop.f32.mrf.mxu0
    %v158 = vadd.f32 %v134, %v157
    %159 = vdwg.mxu0
    %v161 = vperm.slane %v103, 0
    %v163 = vadd.f32 %v158, %v161
    %v164 = vxor.u32 %v163, 2147483648
    %v165 = vmul.f32 %v164, 1.442695
    %v166 = vpow.pop %v165
    %v167 = vadd.f32 %v166, 1.0
    %v168 = vrcp.pop %v167
    %v169 = vmul.f32 %v167, %v168
    %v170 = vsub.f32 1.0, %v169
    %v171 = vmul.f32 %v168, %v170
    %v172 = vadd.f32 %v168, %v171
    %vm173 = vweird.f32 %v167
    %vm174 = vweird.f32 %v168
    %vm175 = vmor %vm173, %vm174
    %v176 = vsel %vm175, %v168, %v172
    %v177 = vand.u32 2147483647, %v167
    %vm178 = vcmp.eq.f32.partialorder %v177, 8.507059e+37
    %v179 = vand.u32 %v167, 2147483648
    %v180 = vor.u32 1.1754944e-38, %v179
    %v181 = vsel %vm178, %v180, %v176
    %v182 = vmul.f32 1.0, %v181
    %v183 = vtanh.pop %v163
    %185 = vrot.lane.b32.xlu0 %v108, 32
    %v186 = vpop.permute.xlu0 %185
    %v188 = vmul.f32 %v182, %v186
    %190 = vrot.lane.b32.xlu0 %v183, 64
    %v191 = vpop.permute.xlu0 %190
    %v193 = vmul.f32 %v182, %v191
    %195 = vrot.lane.b32.xlu0 %v193, 32
    %v196 = vpop.permute.xlu0 %195
    %v198 = vadd.f32 %v188, %v196
    %v199 = vtanh.pop %v198
    %201 = vrot.lane.b32.xlu0 %v199, 64
    %v202 = vpop.permute.xlu0 %201
    %v204 = vmul.f32 %v182, %v202
    %v206 = vsel %vm112, %v107, 0
    %208 = vmatpush.msra.mxu0 0.0
    %209 = vmatpush.msra.mxu0 0.0
    %210 = vmatpush.msra.mxu0 0.0
    %211 = vmatpush.msra.mxu0 0.0
    %212 = vmatpush.msra.mxu0 0.0
    %213 = vmatpush.msra.mxu0 0.0
    %214 = vmatpush.msra.mxu0 0.0
    %215 = vmatpush.msra.mxu0 0.0
    %216 = vmatpush.msra.mxu0 0.0
    %217 = vmatpush.msra.mxu0 0.0
    %218 = vmatpush.msra.mxu0 0.0
    %219 = vmatpush.msra.mxu0 0.0
    %220 = vmatpush.msra.mxu0 %v102
    %221 = vmatpush.msra.mxu0 %v101
    %222 = vmatpush.msra.mxu0 %v100
    %223 = vmatpush.msra.mxu0 %v99
    %224 = vmatmul.f32.gmra.mxu0 %v206
    %v225 = vpop.f32.mrf.mxu0
    %v226 = vadd.f32 0.0, %v225
    %227 = vdwg.mxu0
    %229 = vrot.lane.b32.xlu0 %v204, 32
    %v230 = vpop.permute.xlu0 %229
    %v231 = vsel %vm112, %v230, 0
    %233 = vmatpush.msra.mxu0 0.0
    %234 = vmatpush.msra.mxu0 0.0
    %235 = vmatpush.msra.mxu0 0.0
    %236 = vmatpush.msra.mxu0 0.0
    %237 = vmatpush.msra.mxu0 0.0
    %238 = vmatpush.msra.mxu0 0.0
    %239 = vmatpush.msra.mxu0 0.0
    %240 = vmatpush.msra.mxu0 0.0
    %241 = vmatpush.msra.mxu0 0.0
    %242 = vmatpush.msra.mxu0 0.0
    %243 = vmatpush.msra.mxu0 0.0
    %244 = vmatpush.msra.mxu0 0.0
    %245 = vmatpush.msra.mxu0 %v94
    %246 = vmatpush.msra.mxu0 %v93
    %247 = vmatpush.msra.mxu0 %v92
    %248 = vmatpush.msra.mxu0 %v91
    %249 = vmatmul.f32.gmra.mxu0 %v231
    %v250 = vpop.f32.mrf.mxu0
    %v251 = vadd.f32 %v226, %v250
    %252 = vdwg.mxu0
    %v254 = vperm.slane %v104, 0
    %v256 = vadd.f32 %v251, %v254
    %v257 = vxor.u32 %v256, 2147483648
    %v258 = vmul.f32 %v257, 1.442695
    %v259 = vpow.pop %v258
    %v260 = vadd.f32 %v259, 1.0
    %v261 = vrcp.pop %v260
    %v262 = vmul.f32 %v260, %v261
    %v263 = vsub.f32 1.0, %v262
    %v264 = vmul.f32 %v261, %v263
    %v265 = vadd.f32 %v261, %v264
    %vm266 = vweird.f32 %v260
    %vm267 = vweird.f32 %v261
    %vm268 = vmor %vm266, %vm267
    %v269 = vsel %vm268, %v261, %v265
    %v270 = vand.u32 2147483647, %v260
    %vm271 = vcmp.eq.f32.partialorder %v270, 8.507059e+37
    %v272 = vand.u32 %v260, 2147483648
    %v273 = vor.u32 1.1754944e-38, %v272
    %v274 = vsel %vm271, %v273, %v269
    %v275 = vmul.f32 1.0, %v274
    %v276 = vtanh.pop %v256
    %278 = vrot.lane.b32.xlu0 %v110, 32
    %v279 = vpop.permute.xlu0 %278
    %v281 = vmul.f32 %v275, %v279
    %283 = vrot.lane.b32.xlu0 %v276, 64
    %v284 = vpop.permute.xlu0 %283
    %v286 = vmul.f32 %v275, %v284
    %288 = vrot.lane.b32.xlu0 %v286, 32
    %v289 = vpop.permute.xlu0 %288
    %v291 = vadd.f32 %v281, %v289
    %v292 = vtanh.pop %v291
    %294 = vrot.lane.b32.xlu0 %v292, 64
    %v295 = vpop.permute.xlu0 %294
    %v297 = vmul.f32 %v275, %v295
    %s298 = scalar_lea.vmem %s0, 2
    %v299 = vld [vmem:[%s298] sm:$0x3]
    %300 = vmatpush.msra.mxu0 0.0
    %301 = vmatpush.msra.mxu0 0.0
    %302 = vmatpush.msra.mxu0 0.0
    %303 = vmatpush.msra.mxu0 0.0
    %304 = vmatpush.msra.mxu0 0.0
    %305 = vmatpush.msra.mxu0 0.0
    %306 = vmatpush.msra.mxu0 0.0
    %307 = vmatpush.msra.mxu0 0.0
    %308 = vmatpush.msra.mxu0 0.0
    %309 = vmatpush.msra.mxu0 0.0
    %310 = vmatpush.msra.mxu0 0.0
    %311 = vmatpush.msra.mxu0 0.0
    %312 = vmatpush.msra.mxu0 %v98
    %313 = vmatpush.msra.mxu0 %v97
    %314 = vmatpush.msra.mxu0 %v96
    %315 = vmatpush.msra.mxu0 %v95
    %316 = vmatmul.f32.gmra.mxu0 %v231
    %v317 = vpop.f32.mrf.mxu0
    %v318 = vadd.f32 0.0, %v317
    %319 = vdwg.mxu0
    %v321 = vsel %vm136, %v299, 0
    %323 = vmatpush.msra.mxu0 0.0
    %324 = vmatpush.msra.mxu0 0.0
    %325 = vmatpush.msra.mxu0 0.0
    %326 = vmatpush.msra.mxu0 0.0
    %327 = vmatpush.msra.mxu0 0.0
    %328 = vmatpush.msra.mxu0 0.0
    %329 = vmatpush.msra.mxu0 0.0
    %330 = vmatpush.msra.mxu0 0.0
    %331 = vmatpush.msra.mxu0 0.0
    %332 = vmatpush.msra.mxu0 0.0
    %333 = vmatpush.msra.mxu0 0.0
    %334 = vmatpush.msra.mxu0 0.0
    %335 = vmatpush.msra.mxu0 0.0
    %336 = vmatpush.msra.mxu0 0.0
    %337 = vmatpush.msra.mxu0 0.0
    %338 = vmatpush.msra.mxu0 %v90
    %339 = vmatmul.f32.gmra.mxu0 %v321
    %v340 = vpop.f32.mrf.mxu0
    %v341 = vadd.f32 %v318, %v340
    %342 = vdwg.mxu0
    %v343 = vadd.f32 %v341, %v161
    %v344 = vxor.u32 %v343, 2147483648
    %v345 = vmul.f32 %v344, 1.442695
    %v346 = vpow.pop %v345
    %v347 = vadd.f32 %v346, 1.0
    %v348 = vrcp.pop %v347
    %v349 = vmul.f32 %v347, %v348
    %v350 = vsub.f32 1.0, %v349
    %v351 = vmul.f32 %v348, %v350
    %v352 = vadd.f32 %v348, %v351
    %vm353 = vweird.f32 %v347
    %vm354 = vweird.f32 %v348
    %vm355 = vmor %vm353, %vm354
    %v356 = vsel %vm355, %v348, %v352
    %v357 = vand.u32 2147483647, %v347
    %vm358 = vcmp.eq.f32.partialorder %v357, 8.507059e+37
    %v359 = vand.u32 %v347, 2147483648
    %v360 = vor.u32 1.1754944e-38, %v359
    %v361 = vsel %vm358, %v360, %v356
    %v362 = vmul.f32 1.0, %v361
    %v363 = vtanh.pop %v343
    %v364 = vmul.f32 %v362, %v198
    %366 = vrot.lane.b32.xlu0 %v363, 64
    %v367 = vpop.permute.xlu0 %366
    %v369 = vmul.f32 %v362, %v367
    %371 = vrot.lane.b32.xlu0 %v369, 32
    %v372 = vpop.permute.xlu0 %371
    %v374 = vadd.f32 %v364, %v372
    %v375 = vtanh.pop %v374
    %377 = vrot.lane.b32.xlu0 %v375, 64
    %v378 = vpop.permute.xlu0 %377
    %v380 = vmul.f32 %v362, %v378
    %382 = vrot.lane.b32.xlu0 %v297, 32
    %v383 = vpop.permute.xlu0 %382
    %v384 = vsel %vm112, %v383, 0
    %386 = vmatpush.msra.mxu0 0.0
    %387 = vmatpush.msra.mxu0 0.0
    %388 = vmatpush.msra.mxu0 0.0
    %389 = vmatpush.msra.mxu0 0.0
    %390 = vmatpush.msra.mxu0 0.0
    %391 = vmatpush.msra.mxu0 0.0
    %392 = vmatpush.msra.mxu0 0.0
    %393 = vmatpush.msra.mxu0 0.0
    %394 = vmatpush.msra.mxu0 0.0
    %395 = vmatpush.msra.mxu0 0.0
    %396 = vmatpush.msra.mxu0 0.0
    %397 = vmatpush.msra.mxu0 0.0
    %398 = vmatpush.msra.mxu0 %v102
    %399 = vmatpush.msra.mxu0 %v101
    %400 = vmatpush.msra.mxu0 %v100
    %401 = vmatpush.msra.mxu0 %v99
    %402 = vmatmul.f32.gmra.mxu0 %v384
    %v403 = vpop.f32.mrf.mxu0
    %v404 = vadd.f32 0.0, %v403
    %405 = vdwg.mxu0
    %407 = vrot.lane.b32.xlu0 %v380, 32
    %v408 = vpop.permute.xlu0 %407
    %v409 = vsel %vm112, %v408, 0
    %411 = vmatpush.msra.mxu0 0.0
    %412 = vmatpush.msra.mxu0 0.0
    %413 = vmatpush.msra.mxu0 0.0
    %414 = vmatpush.msra.mxu0 0.0
    %415 = vmatpush.msra.mxu0 0.0
    %416 = vmatpush.msra.mxu0 0.0
    %417 = vmatpush.msra.mxu0 0.0
    %418 = vmatpush.msra.mxu0 0.0
    %419 = vmatpush.msra.mxu0 0.0
    %420 = vmatpush.msra.mxu0 0.0
    %421 = vmatpush.msra.mxu0 0.0
    %422 = vmatpush.msra.mxu0 0.0
    %423 = vmatpush.msra.mxu0 %v94
    %424 = vmatpush.msra.mxu0 %v93
    %425 = vmatpush.msra.mxu0 %v92
    %426 = vmatpush.msra.mxu0 %v91
    %427 = vmatmul.f32.gmra.mxu0 %v409
    %v428 = vpop.f32.mrf.mxu0
    %v429 = vadd.f32 %v404, %v428
    %430 = vdwg.mxu0
    %v431 = vadd.f32 %v429, %v254
    %v432 = vxor.u32 %v431, 2147483648
    %v433 = vmul.f32 %v432, 1.442695
    %v434 = vpow.pop %v433
    %v435 = vadd.f32 %v434, 1.0
    %v436 = vrcp.pop %v435
    %v437 = vmul.f32 %v435, %v436
    %v438 = vsub.f32 1.0, %v437
    %v439 = vmul.f32 %v436, %v438
    %v440 = vadd.f32 %v436, %v439
    %vm441 = vweird.f32 %v435
    %vm442 = vweird.f32 %v436
    %vm443 = vmor %vm441, %vm442
    %v444 = vsel %vm443, %v436, %v440
    %v445 = vand.u32 2147483647, %v435
    %vm446 = vcmp.eq.f32.partialorder %v445, 8.507059e+37
    %v447 = vand.u32 %v435, 2147483648
    %v448 = vor.u32 1.1754944e-38, %v447
    %v449 = vsel %vm446, %v448, %v444
    %v450 = vmul.f32 1.0, %v449
    %v451 = vtanh.pop %v431
    %v452 = vmul.f32 %v450, %v291
    %454 = vrot.lane.b32.xlu0 %v451, 64
    %v455 = vpop.permute.xlu0 %454
    %v457 = vmul.f32 %v450, %v455
    %459 = vrot.lane.b32.xlu0 %v457, 32
    %v460 = vpop.permute.xlu0 %459
    %v462 = vadd.f32 %v452, %v460
    %v463 = vtanh.pop %v462
    %465 = vrot.lane.b32.xlu0 %v463, 64
    %v466 = vpop.permute.xlu0 %465
    %v468 = vmul.f32 %v450, %v466
    %s469 = scalar_lea.vmem %s0, 4
    %v470 = vld [vmem:[%s469] sm:$0x3]
    %471 = vmatpush.msra.mxu0 0.0
    %472 = vmatpush.msra.mxu0 0.0
    %473 = vmatpush.msra.mxu0 0.0
    %474 = vmatpush.msra.mxu0 0.0
    %475 = vmatpush.msra.mxu0 0.0
    %476 = vmatpush.msra.mxu0 0.0
    %477 = vmatpush.msra.mxu0 0.0
    %478 = vmatpush.msra.mxu0 0.0
    %479 = vmatpush.msra.mxu0 0.0
    %480 = vmatpush.msra.mxu0 0.0
    %481 = vmatpush.msra.mxu0 0.0
    %482 = vmatpush.msra.mxu0 0.0
    %483 = vmatpush.msra.mxu0 %v98
    %484 = vmatpush.msra.mxu0 %v97
    %485 = vmatpush.msra.mxu0 %v96
    %486 = vmatpush.msra.mxu0 %v95
    %487 = vmatmul.f32.gmra.mxu0 %v409
    %v488 = vpop.f32.mrf.mxu0
    %v489 = vadd.f32 0.0, %v488
    %490 = vdwg.mxu0
    %v492 = vsel %vm136, %v470, 0
    %494 = vmatpush.msra.mxu0 0.0
    %495 = vmatpush.msra.mxu0 0.0
    %496 = vmatpush.msra.mxu0 0.0
    %497 = vmatpush.msra.mxu0 0.0
    %498 = vmatpush.msra.mxu0 0.0
    %499 = vmatpush.msra.mxu0 0.0
    %500 = vmatpush.msra.mxu0 0.0
    %501 = vmatpush.msra.mxu0 0.0
    %502 = vmatpush.msra.mxu0 0.0
    %503 = vmatpush.msra.mxu0 0.0
    %504 = vmatpush.msra.mxu0 0.0
    %505 = vmatpush.msra.mxu0 0.0
    %506 = vmatpush.msra.mxu0 0.0
    %507 = vmatpush.msra.mxu0 0.0
    %508 = vmatpush.msra.mxu0 0.0
    %509 = vmatpush.msra.mxu0 %v90
    %510 = vmatmul.f32.gmra.mxu0 %v492
    %v511 = vpop.f32.mrf.mxu0
    %v512 = vadd.f32 %v489, %v511
    %513 = vdwg.mxu0
    %v514 = vadd.f32 %v512, %v161
    %v515 = vxor.u32 %v514, 2147483648
    %v516 = vmul.f32 %v515, 1.442695
    %v517 = vpow.pop %v516
    %v518 = vadd.f32 %v517, 1.0
    %v519 = vrcp.pop %v518
    %v520 = vmul.f32 %v518, %v519
    %v521 = vsub.f32 1.0, %v520
    %v522 = vmul.f32 %v519, %v521
    %v523 = vadd.f32 %v519, %v522
    %vm524 = vweird.f32 %v518
    %vm525 = vweird.f32 %v519
    %vm526 = vmor %vm524, %vm525
    %v527 = vsel %vm526, %v519, %v523
    %v528 = vand.u32 2147483647, %v518
    %vm529 = vcmp.eq.f32.partialorder %v528, 8.507059e+37
    %v530 = vand.u32 %v518, 2147483648
    %v531 = vor.u32 1.1754944e-38, %v530
    %v532 = vsel %vm529, %v531, %v527
    %v533 = vmul.f32 1.0, %v532
    %v534 = vtanh.pop %v514
    %v535 = vmul.f32 %v533, %v374
    %537 = vrot.lane.b32.xlu0 %v534, 64
    %v538 = vpop.permute.xlu0 %537
    %v540 = vmul.f32 %v533, %v538
    %542 = vrot.lane.b32.xlu0 %v540, 32
    %v543 = vpop.permute.xlu0 %542
    %v545 = vadd.f32 %v535, %v543
    %v546 = vtanh.pop %v545
    %548 = vrot.lane.b32.xlu0 %v546, 64
    %v549 = vpop.permute.xlu0 %548
    %v551 = vmul.f32 %v533, %v549
    %553 = vrot.lane.b32.xlu0 %v468, 32
    %v554 = vpop.permute.xlu0 %553
    %v555 = vsel %vm112, %v554, 0
    %557 = vmatpush.msra.mxu0 0.0
    %558 = vmatpush.msra.mxu0 0.0
    %559 = vmatpush.msra.mxu0 0.0
    %560 = vmatpush.msra.mxu0 0.0
    %561 = vmatpush.msra.mxu0 0.0
    %562 = vmatpush.msra.mxu0 0.0
    %563 = vmatpush.msra.mxu0 0.0
    %564 = vmatpush.msra.mxu0 0.0
    %565 = vmatpush.msra.mxu0 0.0
    %566 = vmatpush.msra.mxu0 0.0
    %567 = vmatpush.msra.mxu0 0.0
    %568 = vmatpush.msra.mxu0 0.0
    %569 = vmatpush.msra.mxu0 %v102
    %570 = vmatpush.msra.mxu0 %v101
    %571 = vmatpush.msra.mxu0 %v100
    %572 = vmatpush.msra.mxu0 %v99
    %573 = vmatmul.f32.gmra.mxu0 %v555
    %v574 = vpop.f32.mrf.mxu0
    %v575 = vadd.f32 0.0, %v574
    %576 = vdwg.mxu0
    %578 = vrot.lane.b32.xlu0 %v551, 32
    %v579 = vpop.permute.xlu0 %578
    %v580 = vsel %vm112, %v579, 0
    %582 = vmatpush.msra.mxu0 0.0
    %583 = vmatpush.msra.mxu0 0.0
    %584 = vmatpush.msra.mxu0 0.0
    %585 = vmatpush.msra.mxu0 0.0
    %586 = vmatpush.msra.mxu0 0.0
    %587 = vmatpush.msra.mxu0 0.0
    %588 = vmatpush.msra.mxu0 0.0
    %589 = vmatpush.msra.mxu0 0.0
    %590 = vmatpush.msra.mxu0 0.0
    %591 = vmatpush.msra.mxu0 0.0
    %592 = vmatpush.msra.mxu0 0.0
    %593 = vmatpush.msra.mxu0 0.0
    %594 = vmatpush.msra.mxu0 %v94
    %595 = vmatpush.msra.mxu0 %v93
    %596 = vmatpush.msra.mxu0 %v92
    %597 = vmatpush.msra.mxu0 %v91
    %598 = vmatmul.f32.gmra.mxu0 %v580
    %v599 = vpop.f32.mrf.mxu0
    %v600 = vadd.f32 %v575, %v599
    %601 = vdwg.mxu0
    %v602 = vadd.f32 %v600, %v254
    %v603 = vxor.u32 %v602, 2147483648
    %v604 = vmul.f32 %v603, 1.442695
    %v605 = vpow.pop %v604
    %v606 = vadd.f32 %v605, 1.0
    %v607 = vrcp.pop %v606
    %v608 = vmul.f32 %v606, %v607
    %v609 = vsub.f32 1.0, %v608
    %v610 = vmul.f32 %v607, %v609
    %v611 = vadd.f32 %v607, %v610
    %vm612 = vweird.f32 %v606
    %vm613 = vweird.f32 %v607
    %vm614 = vmor %vm612, %vm613
    %v615 = vsel %vm614, %v607, %v611
    %v616 = vand.u32 2147483647, %v606
    %vm617 = vcmp.eq.f32.partialorder %v616, 8.507059e+37
    %v618 = vand.u32 %v606, 2147483648
    %v619 = vor.u32 1.1754944e-38, %v618
    %v620 = vsel %vm617, %v619, %v615
    %v621 = vmul.f32 1.0, %v620
    %v622 = vtanh.pop %v602
    %v623 = vmul.f32 %v621, %v462
    %625 = vrot.lane.b32.xlu0 %v622, 64
    %v626 = vpop.permute.xlu0 %625
    %v628 = vmul.f32 %v621, %v626
    %630 = vrot.lane.b32.xlu0 %v628, 32
    %v631 = vpop.permute.xlu0 %630
    %v633 = vadd.f32 %v623, %v631
    %v634 = vtanh.pop %v633
    %636 = vrot.lane.b32.xlu0 %v634, 64
    %v637 = vpop.permute.xlu0 %636
    %v639 = vmul.f32 %v621, %v637
    %s640 = scalar_lea.vmem %s0, 6
    %v641 = vld [vmem:[%s640] sm:$0x3]
    %642 = vmatpush.msra.mxu0 0.0
    %643 = vmatpush.msra.mxu0 0.0
    %644 = vmatpush.msra.mxu0 0.0
    %645 = vmatpush.msra.mxu0 0.0
    %646 = vmatpush.msra.mxu0 0.0
    %647 = vmatpush.msra.mxu0 0.0
    %648 = vmatpush.msra.mxu0 0.0
    %649 = vmatpush.msra.mxu0 0.0
    %650 = vmatpush.msra.mxu0 0.0
    %651 = vmatpush.msra.mxu0 0.0
    %652 = vmatpush.msra.mxu0 0.0
    %653 = vmatpush.msra.mxu0 0.0
    %654 = vmatpush.msra.mxu0 %v98
    %655 = vmatpush.msra.mxu0 %v97
    %656 = vmatpush.msra.mxu0 %v96
    %657 = vmatpush.msra.mxu0 %v95
    %658 = vmatmul.f32.gmra.mxu0 %v580
    %v659 = vpop.f32.mrf.mxu0
    %v660 = vadd.f32 0.0, %v659
    %661 = vdwg.mxu0
    %v663 = vsel %vm136, %v641, 0
    %665 = vmatpush.msra.mxu0 0.0
    %666 = vmatpush.msra.mxu0 0.0
    %667 = vmatpush.msra.mxu0 0.0
    %668 = vmatpush.msra.mxu0 0.0
    %669 = vmatpush.msra.mxu0 0.0
    %670 = vmatpush.msra.mxu0 0.0
    %671 = vmatpush.msra.mxu0 0.0
    %672 = vmatpush.msra.mxu0 0.0
    %673 = vmatpush.msra.mxu0 0.0
    %674 = vmatpush.msra.mxu0 0.0
    %675 = vmatpush.msra.mxu0 0.0
    %676 = vmatpush.msra.mxu0 0.0
    %677 = vmatpush.msra.mxu0 0.0
    %678 = vmatpush.msra.mxu0 0.0
    %679 = vmatpush.msra.mxu0 0.0
    %680 = vmatpush.msra.mxu0 %v90
    %681 = vmatmul.f32.gmra.mxu0 %v663
    %v682 = vpop.f32.mrf.mxu0
    %v683 = vadd.f32 %v660, %v682
    %684 = vdwg.mxu0
    %v685 = vadd.f32 %v683, %v161
    %v686 = vxor.u32 %v685, 2147483648
    %v687 = vmul.f32 %v686, 1.442695
    %v688 = vpow.pop %v687
    %v689 = vadd.f32 %v688, 1.0
    %v690 = vrcp.pop %v689
    %v691 = vmul.f32 %v689, %v690
    %v692 = vsub.f32 1.0, %v691
    %v693 = vmul.f32 %v690, %v692
    %v694 = vadd.f32 %v690, %v693
    %vm695 = vweird.f32 %v689
    %vm696 = vweird.f32 %v690
    %vm697 = vmor %vm695, %vm696
    %v698 = vsel %vm697, %v690, %v694
    %v699 = vand.u32 2147483647, %v689
    %vm700 = vcmp.eq.f32.partialorder %v699, 8.507059e+37
    %v701 = vand.u32 %v689, 2147483648
    %v702 = vor.u32 1.1754944e-38, %v701
    %v703 = vsel %vm700, %v702, %v698
    %v704 = vmul.f32 1.0, %v703
    %v705 = vtanh.pop %v685
    %v706 = vmul.f32 %v704, %v545
    %708 = vrot.lane.b32.xlu0 %v705, 64
    %v709 = vpop.permute.xlu0 %708
    %v711 = vmul.f32 %v704, %v709
    %713 = vrot.lane.b32.xlu0 %v711, 32
    %v714 = vpop.permute.xlu0 %713
    %v716 = vadd.f32 %v706, %v714
    %v717 = vtanh.pop %v716
    %719 = vrot.lane.b32.xlu0 %v717, 64
    %v720 = vpop.permute.xlu0 %719
    %v722 = vmul.f32 %v704, %v720
    %724 = vrot.lane.b32.xlu0 %v639, 32
    %v725 = vpop.permute.xlu0 %724
    %v726 = vsel %vm112, %v725, 0
    %728 = vmatpush.msra.mxu0 0.0
    %729 = vmatpush.msra.mxu0 0.0
    %730 = vmatpush.msra.mxu0 0.0
    %731 = vmatpush.msra.mxu0 0.0
    %732 = vmatpush.msra.mxu0 0.0
    %733 = vmatpush.msra.mxu0 0.0
    %734 = vmatpush.msra.mxu0 0.0
    %735 = vmatpush.msra.mxu0 0.0
    %736 = vmatpush.msra.mxu0 0.0
    %737 = vmatpush.msra.mxu0 0.0
    %738 = vmatpush.msra.mxu0 0.0
    %739 = vmatpush.msra.mxu0 0.0
    %740 = vmatpush.msra.mxu0 %v102
    %741 = vmatpush.msra.mxu0 %v101
    %742 = vmatpush.msra.mxu0 %v100
    %743 = vmatpush.msra.mxu0 %v99
    %744 = vmatmul.f32.gmra.mxu0 %v726
    %v745 = vpop.f32.mrf.mxu0
    %v746 = vadd.f32 0.0, %v745
    %747 = vdwg.mxu0
    %749 = vrot.lane.b32.xlu0 %v722, 32
    %v750 = vpop.permute.xlu0 %749
    %v751 = vsel %vm112, %v750, 0
    %753 = vmatpush.msra.mxu0 0.0
    %754 = vmatpush.msra.mxu0 0.0
    %755 = vmatpush.msra.mxu0 0.0
    %756 = vmatpush.msra.mxu0 0.0
    %757 = vmatpush.msra.mxu0 0.0
    %758 = vmatpush.msra.mxu0 0.0
    %759 = vmatpush.msra.mxu0 0.0
    %760 = vmatpush.msra.mxu0 0.0
    %761 = vmatpush.msra.mxu0 0.0
    %762 = vmatpush.msra.mxu0 0.0
    %763 = vmatpush.msra.mxu0 0.0
    %764 = vmatpush.msra.mxu0 0.0
    %765 = vmatpush.msra.mxu0 %v94
    %766 = vmatpush.msra.mxu0 %v93
    %767 = vmatpush.msra.mxu0 %v92
    %768 = vmatpush.msra.mxu0 %v91
    %769 = vmatmul.f32.gmra.mxu0 %v751
    %v770 = vpop.f32.mrf.mxu0
    %v771 = vadd.f32 %v746, %v770
    %772 = vdwg.mxu0
    %v773 = vadd.f32 %v771, %v254
    %v774 = vxor.u32 %v773, 2147483648
    %v775 = vmul.f32 %v774, 1.442695
    %v776 = vpow.pop %v775
    %v777 = vadd.f32 %v776, 1.0
    %v778 = vrcp.pop %v777
    %v779 = vmul.f32 %v777, %v778
    %v780 = vsub.f32 1.0, %v779
    %v781 = vmul.f32 %v778, %v780
    %v782 = vadd.f32 %v778, %v781
    %vm783 = vweird.f32 %v777
    %vm784 = vweird.f32 %v778
    %vm785 = vmor %vm783, %vm784
    %v786 = vsel %vm785, %v778, %v782
    %v787 = vand.u32 2147483647, %v777
    %vm788 = vcmp.eq.f32.partialorder %v787, 8.507059e+37
    %v789 = vand.u32 %v777, 2147483648
    %v790 = vor.u32 1.1754944e-38, %v789
    %v791 = vsel %vm788, %v790, %v786
    %v792 = vmul.f32 1.0, %v791
    %v793 = vtanh.pop %v773
    %v794 = vmul.f32 %v792, %v633
    %796 = vrot.lane.b32.xlu0 %v793, 64
    %v797 = vpop.permute.xlu0 %796
    %v799 = vmul.f32 %v792, %v797
    %801 = vrot.lane.b32.xlu0 %v799, 32
    %v802 = vpop.permute.xlu0 %801
    %v804 = vadd.f32 %v794, %v802
    %v805 = vtanh.pop %v804
    %807 = vrot.lane.b32.xlu0 %v805, 64
    %v808 = vpop.permute.xlu0 %807
    %v810 = vmul.f32 %v792, %v808
    %s811 = scalar_lea.vmem %s0, 8
    %v812 = vld [vmem:[%s811] sm:$0x3]
    %813 = vmatpush.msra.mxu0 0.0
    %814 = vmatpush.msra.mxu0 0.0
    %815 = vmatpush.msra.mxu0 0.0
    %816 = vmatpush.msra.mxu0 0.0
    %817 = vmatpush.msra.mxu0 0.0
    %818 = vmatpush.msra.mxu0 0.0
    %819 = vmatpush.msra.mxu0 0.0
    %820 = vmatpush.msra.mxu0 0.0
    %821 = vmatpush.msra.mxu0 0.0
    %822 = vmatpush.msra.mxu0 0.0
    %823 = vmatpush.msra.mxu0 0.0
    %824 = vmatpush.msra.mxu0 0.0
    %825 = vmatpush.msra.mxu0 %v98
    %826 = vmatpush.msra.mxu0 %v97
    %827 = vmatpush.msra.mxu0 %v96
    %828 = vmatpush.msra.mxu0 %v95
    %829 = vmatmul.f32.gmra.mxu0 %v751
    %v830 = vpop.f32.mrf.mxu0
    %v831 = vadd.f32 0.0, %v830
    %832 = vdwg.mxu0
    %v834 = vsel %vm136, %v812, 0
    %836 = vmatpush.msra.mxu0 0.0
    %837 = vmatpush.msra.mxu0 0.0
    %838 = vmatpush.msra.mxu0 0.0
    %839 = vmatpush.msra.mxu0 0.0
    %840 = vmatpush.msra.mxu0 0.0
    %841 = vmatpush.msra.mxu0 0.0
    %842 = vmatpush.msra.mxu0 0.0
    %843 = vmatpush.msra.mxu0 0.0
    %844 = vmatpush.msra.mxu0 0.0
    %845 = vmatpush.msra.mxu0 0.0
    %846 = vmatpush.msra.mxu0 0.0
    %847 = vmatpush.msra.mxu0 0.0
    %848 = vmatpush.msra.mxu0 0.0
    %849 = vmatpush.msra.mxu0 0.0
    %850 = vmatpush.msra.mxu0 0.0
    %851 = vmatpush.msra.mxu0 %v90
    %852 = vmatmul.f32.gmra.mxu0 %v834
    %v853 = vpop.f32.mrf.mxu0
    %v854 = vadd.f32 %v831, %v853
    %855 = vdwg.mxu0
    %v856 = vadd.f32 %v854, %v161
    %v857 = vxor.u32 %v856, 2147483648
    %v858 = vmul.f32 %v857, 1.442695
    %v859 = vpow.pop %v858
    %v860 = vadd.f32 %v859, 1.0
    %v861 = vrcp.pop %v860
    %v862 = vmul.f32 %v860, %v861
    %v863 = vsub.f32 1.0, %v862
    %v864 = vmul.f32 %v861, %v863
    %v865 = vadd.f32 %v861, %v864
    %vm866 = vweird.f32 %v860
    %vm867 = vweird.f32 %v861
    %vm868 = vmor %vm866, %vm867
    %v869 = vsel %vm868, %v861, %v865
    %v870 = vand.u32 2147483647, %v860
    %vm871 = vcmp.eq.f32.partialorder %v870, 8.507059e+37
    %v872 = vand.u32 %v860, 2147483648
    %v873 = vor.u32 1.1754944e-38, %v872
    %v874 = vsel %vm871, %v873, %v869
    %v875 = vmul.f32 1.0, %v874
    %v876 = vtanh.pop %v856
    %v877 = vmul.f32 %v875, %v716
    %879 = vrot.lane.b32.xlu0 %v876, 64
    %v880 = vpop.permute.xlu0 %879
    %v882 = vmul.f32 %v875, %v880
    %884 = vrot.lane.b32.xlu0 %v882, 32
    %v885 = vpop.permute.xlu0 %884
    %v887 = vadd.f32 %v877, %v885
    %v888 = vtanh.pop %v887
    %890 = vrot.lane.b32.xlu0 %v888, 64
    %v891 = vpop.permute.xlu0 %890
    %v893 = vmul.f32 %v875, %v891
    %895 = vrot.lane.b32.xlu0 %v810, 32
    %v896 = vpop.permute.xlu0 %895
    %v897 = vsel %vm112, %v896, 0
    %899 = vmatpush.msra.mxu0 0.0
    %900 = vmatpush.msra.mxu0 0.0
    %901 = vmatpush.msra.mxu0 0.0
    %902 = vmatpush.msra.mxu0 0.0
    %903 = vmatpush.msra.mxu0 0.0
    %904 = vmatpush.msra.mxu0 0.0
    %905 = vmatpush.msra.mxu0 0.0
    %906 = vmatpush.msra.mxu0 0.0
    %907 = vmatpush.msra.mxu0 0.0
    %908 = vmatpush.msra.mxu0 0.0
    %909 = vmatpush.msra.mxu0 0.0
    %910 = vmatpush.msra.mxu0 0.0
    %911 = vmatpush.msra.mxu0 %v102
    %912 = vmatpush.msra.mxu0 %v101
    %913 = vmatpush.msra.mxu0 %v100
    %914 = vmatpush.msra.mxu0 %v99
    %915 = vmatmul.f32.gmra.mxu0 %v897
    %v916 = vpop.f32.mrf.mxu0
    %v917 = vadd.f32 0.0, %v916
    %918 = vdwg.mxu0
    %920 = vrot.lane.b32.xlu0 %v893, 32
    %v921 = vpop.permute.xlu0 %920
    %v922 = vsel %vm112, %v921, 0
    %924 = vmatpush.msra.mxu0 0.0
    %925 = vmatpush.msra.mxu0 0.0
    %926 = vmatpush.msra.mxu0 0.0
    %927 = vmatpush.msra.mxu0 0.0
    %928 = vmatpush.msra.mxu0 0.0
    %929 = vmatpush.msra.mxu0 0.0
    %930 = vmatpush.msra.mxu0 0.0
    %931 = vmatpush.msra.mxu0 0.0
    %932 = vmatpush.msra.mxu0 0.0
    %933 = vmatpush.msra.mxu0 0.0
    %934 = vmatpush.msra.mxu0 0.0
    %935 = vmatpush.msra.mxu0 0.0
    %936 = vmatpush.msra.mxu0 %v94
    %937 = vmatpush.msra.mxu0 %v93
    %938 = vmatpush.msra.mxu0 %v92
    %939 = vmatpush.msra.mxu0 %v91
    %940 = vmatmul.f32.gmra.mxu0 %v922
    %v941 = vpop.f32.mrf.mxu0
    %v942 = vadd.f32 %v917, %v941
    %943 = vdwg.mxu0
    %v944 = vadd.f32 %v942, %v254
    %v945 = vxor.u32 %v944, 2147483648
    %v946 = vmul.f32 %v945, 1.442695
    %v947 = vpow.pop %v946
    %v948 = vadd.f32 %v947, 1.0
    %v949 = vrcp.pop %v948
    %v950 = vmul.f32 %v948, %v949
    %v951 = vsub.f32 1.0, %v950
    %v952 = vmul.f32 %v949, %v951
    %v953 = vadd.f32 %v949, %v952
    %vm954 = vweird.f32 %v948
    %vm955 = vweird.f32 %v949
    %vm956 = vmor %vm954, %vm955
    %v957 = vsel %vm956, %v949, %v953
    %v958 = vand.u32 2147483647, %v948
    %vm959 = vcmp.eq.f32.partialorder %v958, 8.507059e+37
    %v960 = vand.u32 %v948, 2147483648
    %v961 = vor.u32 1.1754944e-38, %v960
    %v962 = vsel %vm959, %v961, %v957
    %v963 = vmul.f32 1.0, %v962
    %v964 = vtanh.pop %v944
    %v965 = vmul.f32 %v963, %v804
    %967 = vrot.lane.b32.xlu0 %v964, 64
    %v968 = vpop.permute.xlu0 %967
    %v970 = vmul.f32 %v963, %v968
    %972 = vrot.lane.b32.xlu0 %v970, 32
    %v973 = vpop.permute.xlu0 %972
    %v975 = vadd.f32 %v965, %v973
    %v976 = vtanh.pop %v975
    %978 = vrot.lane.b32.xlu0 %v976, 64
    %v979 = vpop.permute.xlu0 %978
    %v981 = vmul.f32 %v963, %v979
    %s982 = scalar_lea.vmem %s0, 10
    %v983 = vld [vmem:[%s982] sm:$0x3]
    %984 = vmatpush.msra.mxu0 0.0
    %985 = vmatpush.msra.mxu0 0.0
    %986 = vmatpush.msra.mxu0 0.0
    %987 = vmatpush.msra.mxu0 0.0
    %988 = vmatpush.msra.mxu0 0.0
    %989 = vmatpush.msra.mxu0 0.0
    %990 = vmatpush.msra.mxu0 0.0
    %991 = vmatpush.msra.mxu0 0.0
    %992 = vmatpush.msra.mxu0 0.0
    %993 = vmatpush.msra.mxu0 0.0
    %994 = vmatpush.msra.mxu0 0.0
    %995 = vmatpush.msra.mxu0 0.0
    %996 = vmatpush.msra.mxu0 %v98
    %997 = vmatpush.msra.mxu0 %v97
    %998 = vmatpush.msra.mxu0 %v96
    %999 = vmatpush.msra.mxu0 %v95
    %1000 = vmatmul.f32.gmra.mxu0 %v922
    %v1001 = vpop.f32.mrf.mxu0
    %v1002 = vadd.f32 0.0, %v1001
    %1003 = vdwg.mxu0
    %v1005 = vsel %vm136, %v983, 0
    %1007 = vmatpush.msra.mxu0 0.0
    %1008 = vmatpush.msra.mxu0 0.0
    %1009 = vmatpush.msra.mxu0 0.0
    %1010 = vmatpush.msra.mxu0 0.0
    %1011 = vmatpush.msra.mxu0 0.0
    %1012 = vmatpush.msra.mxu0 0.0
    %1013 = vmatpush.msra.mxu0 0.0
    %1014 = vmatpush.msra.mxu0 0.0
    %1015 = vmatpush.msra.mxu0 0.0
    %1016 = vmatpush.msra.mxu0 0.0
    %1017 = vmatpush.msra.mxu0 0.0
    %1018 = vmatpush.msra.mxu0 0.0
    %1019 = vmatpush.msra.mxu0 0.0
    %1020 = vmatpush.msra.mxu0 0.0
    %1021 = vmatpush.msra.mxu0 0.0
    %1022 = vmatpush.msra.mxu0 %v90
    %1023 = vmatmul.f32.gmra.mxu0 %v1005
    %v1024 = vpop.f32.mrf.mxu0
    %v1025 = vadd.f32 %v1002, %v1024
    %1026 = vdwg.mxu0
    %v1027 = vadd.f32 %v1025, %v161
    %v1028 = vxor.u32 %v1027, 2147483648
    %v1029 = vmul.f32 %v1028, 1.442695
    %v1030 = vpow.pop %v1029
    %v1031 = vadd.f32 %v1030, 1.0
    %v1032 = vrcp.pop %v1031
    %v1033 = vmul.f32 %v1031, %v1032
    %v1034 = vsub.f32 1.0, %v1033
    %v1035 = vmul.f32 %v1032, %v1034
    %v1036 = vadd.f32 %v1032, %v1035
    %vm1037 = vweird.f32 %v1031
    %vm1038 = vweird.f32 %v1032
    %vm1039 = vmor %vm1037, %vm1038
    %v1040 = vsel %vm1039, %v1032, %v1036
    %v1041 = vand.u32 2147483647, %v1031
    %vm1042 = vcmp.eq.f32.partialorder %v1041, 8.507059e+37
    %v1043 = vand.u32 %v1031, 2147483648
    %v1044 = vor.u32 1.1754944e-38, %v1043
    %v1045 = vsel %vm1042, %v1044, %v1040
    %v1046 = vmul.f32 1.0, %v1045
    %v1047 = vtanh.pop %v1027
    %v1048 = vmul.f32 %v1046, %v887
    %1050 = vrot.lane.b32.xlu0 %v1047, 64
    %v1051 = vpop.permute.xlu0 %1050
    %v1053 = vmul.f32 %v1046, %v1051
    %1055 = vrot.lane.b32.xlu0 %v1053, 32
    %v1056 = vpop.permute.xlu0 %1055
    %v1058 = vadd.f32 %v1048, %v1056
    %v1059 = vtanh.pop %v1058
    %1061 = vrot.lane.b32.xlu0 %v1059, 64
    %v1062 = vpop.permute.xlu0 %1061
    %v1064 = vmul.f32 %v1046, %v1062
    %1066 = vrot.lane.b32.xlu0 %v981, 32
    %v1067 = vpop.permute.xlu0 %1066
    %v1068 = vsel %vm112, %v1067, 0
    %1070 = vmatpush.msra.mxu0 0.0
    %1071 = vmatpush.msra.mxu0 0.0
    %1072 = vmatpush.msra.mxu0 0.0
    %1073 = vmatpush.msra.mxu0 0.0
    %1074 = vmatpush.msra.mxu0 0.0
    %1075 = vmatpush.msra.mxu0 0.0
    %1076 = vmatpush.msra.mxu0 0.0
    %1077 = vmatpush.msra.mxu0 0.0
    %1078 = vmatpush.msra.mxu0 0.0
    %1079 = vmatpush.msra.mxu0 0.0
    %1080 = vmatpush.msra.mxu0 0.0
    %1081 = vmatpush.msra.mxu0 0.0
    %1082 = vmatpush.msra.mxu0 %v102
    %1083 = vmatpush.msra.mxu0 %v101
    %1084 = vmatpush.msra.mxu0 %v100
    %1085 = vmatpush.msra.mxu0 %v99
    %1086 = vmatmul.f32.gmra.mxu0 %v1068
    %v1087 = vpop.f32.mrf.mxu0
    %v1088 = vadd.f32 0.0, %v1087
    %1089 = vdwg.mxu0
    %1091 = vrot.lane.b32.xlu0 %v1064, 32
    %v1092 = vpop.permute.xlu0 %1091
    %v1093 = vsel %vm112, %v1092, 0
    %1095 = vmatpush.msra.mxu0 0.0
    %1096 = vmatpush.msra.mxu0 0.0
    %1097 = vmatpush.msra.mxu0 0.0
    %1098 = vmatpush.msra.mxu0 0.0
    %1099 = vmatpush.msra.mxu0 0.0
    %1100 = vmatpush.msra.mxu0 0.0
    %1101 = vmatpush.msra.mxu0 0.0
    %1102 = vmatpush.msra.mxu0 0.0
    %1103 = vmatpush.msra.mxu0 0.0
    %1104 = vmatpush.msra.mxu0 0.0
    %1105 = vmatpush.msra.mxu0 0.0
    %1106 = vmatpush.msra.mxu0 0.0
    %1107 = vmatpush.msra.mxu0 %v94
    %1108 = vmatpush.msra.mxu0 %v93
    %1109 = vmatpush.msra.mxu0 %v92
    %1110 = vmatpush.msra.mxu0 %v91
    %1111 = vmatmul.f32.gmra.mxu0 %v1093
    %v1112 = vpop.f32.mrf.mxu0
    %v1113 = vadd.f32 %v1088, %v1112
    %1114 = vdwg.mxu0
    %v1115 = vadd.f32 %v1113, %v254
    %v1116 = vxor.u32 %v1115, 2147483648
    %v1117 = vmul.f32 %v1116, 1.442695
    %v1118 = vpow.pop %v1117
    %v1119 = vadd.f32 %v1118, 1.0
    %v1120 = vrcp.pop %v1119
    %v1121 = vmul.f32 %v1119, %v1120
    %v1122 = vsub.f32 1.0, %v1121
    %v1123 = vmul.f32 %v1120, %v1122
    %v1124 = vadd.f32 %v1120, %v1123
    %vm1125 = vweird.f32 %v1119
    %vm1126 = vweird.f32 %v1120
    %vm1127 = vmor %vm1125, %vm1126
    %v1128 = vsel %vm1127, %v1120, %v1124
    %v1129 = vand.u32 2147483647, %v1119
    %vm1130 = vcmp.eq.f32.partialorder %v1129, 8.507059e+37
    %v1131 = vand.u32 %v1119, 2147483648
    %v1132 = vor.u32 1.1754944e-38, %v1131
    %v1133 = vsel %vm1130, %v1132, %v1128
    %v1134 = vmul.f32 1.0, %v1133
    %v1135 = vtanh.pop %v1115
    %v1136 = vmul.f32 %v1134, %v975
    %1138 = vrot.lane.b32.xlu0 %v1135, 64
    %v1139 = vpop.permute.xlu0 %1138
    %v1141 = vmul.f32 %v1134, %v1139
    %1143 = vrot.lane.b32.xlu0 %v1141, 32
    %v1144 = vpop.permute.xlu0 %1143
    %v1146 = vadd.f32 %v1136, %v1144
    %v1147 = vtanh.pop %v1146
    %1149 = vrot.lane.b32.xlu0 %v1147, 64
    %v1150 = vpop.permute.xlu0 %1149
    %v1152 = vmul.f32 %v1134, %v1150
    %s1153 = scalar_lea.vmem %s0, 12
    %v1154 = vld [vmem:[%s1153] sm:$0x3]
    %1155 = vmatpush.msra.mxu0 0.0
    %1156 = vmatpush.msra.mxu0 0.0
    %1157 = vmatpush.msra.mxu0 0.0
    %1158 = vmatpush.msra.mxu0 0.0
    %1159 = vmatpush.msra.mxu0 0.0
    %1160 = vmatpush.msra.mxu0 0.0
    %1161 = vmatpush.msra.mxu0 0.0
    %1162 = vmatpush.msra.mxu0 0.0
    %1163 = vmatpush.msra.mxu0 0.0
    %1164 = vmatpush.msra.mxu0 0.0
    %1165 = vmatpush.msra.mxu0 0.0
    %1166 = vmatpush.msra.mxu0 0.0
    %1167 = vmatpush.msra.mxu0 %v98
    %1168 = vmatpush.msra.mxu0 %v97
    %1169 = vmatpush.msra.mxu0 %v96
    %1170 = vmatpush.msra.mxu0 %v95
    %1171 = vmatmul.f32.gmra.mxu0 %v1093
    %v1172 = vpop.f32.mrf.mxu0
    %v1173 = vadd.f32 0.0, %v1172
    %1174 = vdwg.mxu0
    %v1176 = vsel %vm136, %v1154, 0
    %1178 = vmatpush.msra.mxu0 0.0
    %1179 = vmatpush.msra.mxu0 0.0
    %1180 = vmatpush.msra.mxu0 0.0
    %1181 = vmatpush.msra.mxu0 0.0
    %1182 = vmatpush.msra.mxu0 0.0
    %1183 = vmatpush.msra.mxu0 0.0
    %1184 = vmatpush.msra.mxu0 0.0
    %1185 = vmatpush.msra.mxu0 0.0
    %1186 = vmatpush.msra.mxu0 0.0
    %1187 = vmatpush.msra.mxu0 0.0
    %1188 = vmatpush.msra.mxu0 0.0
    %1189 = vmatpush.msra.mxu0 0.0
    %1190 = vmatpush.msra.mxu0 0.0
    %1191 = vmatpush.msra.mxu0 0.0
    %1192 = vmatpush.msra.mxu0 0.0
    %1193 = vmatpush.msra.mxu0 %v90
    %1194 = vmatmul.f32.gmra.mxu0 %v1176
    %v1195 = vpop.f32.mrf.mxu0
    %v1196 = vadd.f32 %v1173, %v1195
    %1197 = vdwg.mxu0
    %v1198 = vadd.f32 %v1196, %v161
    %v1199 = vxor.u32 %v1198, 2147483648
    %v1200 = vmul.f32 %v1199, 1.442695
    %v1201 = vpow.pop %v1200
    %v1202 = vadd.f32 %v1201, 1.0
    %v1203 = vrcp.pop %v1202
    %v1204 = vmul.f32 %v1202, %v1203
    %v1205 = vsub.f32 1.0, %v1204
    %v1206 = vmul.f32 %v1203, %v1205
    %v1207 = vadd.f32 %v1203, %v1206
    %vm1208 = vweird.f32 %v1202
    %vm1209 = vweird.f32 %v1203
    %vm1210 = vmor %vm1208, %vm1209
    %v1211 = vsel %vm1210, %v1203, %v1207
    %v1212 = vand.u32 2147483647, %v1202
    %vm1213 = vcmp.eq.f32.partialorder %v1212, 8.507059e+37
    %v1214 = vand.u32 %v1202, 2147483648
    %v1215 = vor.u32 1.1754944e-38, %v1214
    %v1216 = vsel %vm1213, %v1215, %v1211
    %v1217 = vmul.f32 1.0, %v1216
    %v1218 = vtanh.pop %v1198
    %v1219 = vmul.f32 %v1217, %v1058
    %1221 = vrot.lane.b32.xlu0 %v1218, 64
    %v1222 = vpop.permute.xlu0 %1221
    %v1224 = vmul.f32 %v1217, %v1222
    %1226 = vrot.lane.b32.xlu0 %v1224, 32
    %v1227 = vpop.permute.xlu0 %1226
    %v1229 = vadd.f32 %v1219, %v1227
    %v1230 = vtanh.pop %v1229
    %1232 = vrot.lane.b32.xlu0 %v1230, 64
    %v1233 = vpop.permute.xlu0 %1232
    %v1235 = vmul.f32 %v1217, %v1233
    %1237 = vrot.lane.b32.xlu0 %v1152, 32
    %v1238 = vpop.permute.xlu0 %1237
    %v1239 = vsel %vm112, %v1238, 0
    %1241 = vmatpush.msra.mxu0 0.0
    %1242 = vmatpush.msra.mxu0 0.0
    %1243 = vmatpush.msra.mxu0 0.0
    %1244 = vmatpush.msra.mxu0 0.0
    %1245 = vmatpush.msra.mxu0 0.0
    %1246 = vmatpush.msra.mxu0 0.0
    %1247 = vmatpush.msra.mxu0 0.0
    %1248 = vmatpush.msra.mxu0 0.0
    %1249 = vmatpush.msra.mxu0 0.0
    %1250 = vmatpush.msra.mxu0 0.0
    %1251 = vmatpush.msra.mxu0 0.0
    %1252 = vmatpush.msra.mxu0 0.0
    %1253 = vmatpush.msra.mxu0 %v102
    %1254 = vmatpush.msra.mxu0 %v101
    %1255 = vmatpush.msra.mxu0 %v100
    %1256 = vmatpush.msra.mxu0 %v99
    %1257 = vmatmul.f32.gmra.mxu0 %v1239
    %v1258 = vpop.f32.mrf.mxu0
    %v1259 = vadd.f32 0.0, %v1258
    %1260 = vdwg.mxu0
    %1262 = vrot.lane.b32.xlu0 %v1235, 32
    %v1263 = vpop.permute.xlu0 %1262
    %v1264 = vsel %vm112, %v1263, 0
    %1266 = vmatpush.msra.mxu0 0.0
    %1267 = vmatpush.msra.mxu0 0.0
    %1268 = vmatpush.msra.mxu0 0.0
    %1269 = vmatpush.msra.mxu0 0.0
    %1270 = vmatpush.msra.mxu0 0.0
    %1271 = vmatpush.msra.mxu0 0.0
    %1272 = vmatpush.msra.mxu0 0.0
    %1273 = vmatpush.msra.mxu0 0.0
    %1274 = vmatpush.msra.mxu0 0.0
    %1275 = vmatpush.msra.mxu0 0.0
    %1276 = vmatpush.msra.mxu0 0.0
    %1277 = vmatpush.msra.mxu0 0.0
    %1278 = vmatpush.msra.mxu0 %v94
    %1279 = vmatpush.msra.mxu0 %v93
    %1280 = vmatpush.msra.mxu0 %v92
    %1281 = vmatpush.msra.mxu0 %v91
    %1282 = vmatmul.f32.gmra.mxu0 %v1264
    %v1283 = vpop.f32.mrf.mxu0
    %v1284 = vadd.f32 %v1259, %v1283
    %1285 = vdwg.mxu0
    %v1286 = vadd.f32 %v1284, %v254
    %v1287 = vxor.u32 %v1286, 2147483648
    %v1288 = vmul.f32 %v1287, 1.442695
    %v1289 = vpow.pop %v1288
    %v1290 = vadd.f32 %v1289, 1.0
    %v1291 = vrcp.pop %v1290
    %v1292 = vmul.f32 %v1290, %v1291
    %v1293 = vsub.f32 1.0, %v1292
    %v1294 = vmul.f32 %v1291, %v1293
    %v1295 = vadd.f32 %v1291, %v1294
    %vm1296 = vweird.f32 %v1290
    %vm1297 = vweird.f32 %v1291
    %vm1298 = vmor %vm1296, %vm1297
    %v1299 = vsel %vm1298, %v1291, %v1295
    %v1300 = vand.u32 2147483647, %v1290
    %vm1301 = vcmp.eq.f32.partialorder %v1300, 8.507059e+37
    %v1302 = vand.u32 %v1290, 2147483648
    %v1303 = vor.u32 1.1754944e-38, %v1302
    %v1304 = vsel %vm1301, %v1303, %v1299
    %v1305 = vmul.f32 1.0, %v1304
    %v1306 = vtanh.pop %v1286
    %v1307 = vmul.f32 %v1305, %v1146
    %1309 = vrot.lane.b32.xlu0 %v1306, 64
    %v1310 = vpop.permute.xlu0 %1309
    %v1312 = vmul.f32 %v1305, %v1310
    %1314 = vrot.lane.b32.xlu0 %v1312, 32
    %v1315 = vpop.permute.xlu0 %1314
    %v1317 = vadd.f32 %v1307, %v1315
    %v1318 = vtanh.pop %v1317
    %1320 = vrot.lane.b32.xlu0 %v1318, 64
    %v1321 = vpop.permute.xlu0 %1320
    %v1323 = vmul.f32 %v1305, %v1321
    %s1324 = scalar_lea.vmem %s0, 14
    %v1325 = vld [vmem:[%s1324] sm:$0x3]
    %1326 = vmatpush.msra.mxu0 0.0
    %1327 = vmatpush.msra.mxu0 0.0
    %1328 = vmatpush.msra.mxu0 0.0
    %1329 = vmatpush.msra.mxu0 0.0
    %1330 = vmatpush.msra.mxu0 0.0
    %1331 = vmatpush.msra.mxu0 0.0
    %1332 = vmatpush.msra.mxu0 0.0
    %1333 = vmatpush.msra.mxu0 0.0
    %1334 = vmatpush.msra.mxu0 0.0
    %1335 = vmatpush.msra.mxu0 0.0
    %1336 = vmatpush.msra.mxu0 0.0
    %1337 = vmatpush.msra.mxu0 0.0
    %1338 = vmatpush.msra.mxu0 %v98
    %1339 = vmatpush.msra.mxu0 %v97
    %1340 = vmatpush.msra.mxu0 %v96
    %1341 = vmatpush.msra.mxu0 %v95
    %1342 = vmatmul.f32.gmra.mxu0 %v1264
    %v1343 = vpop.f32.mrf.mxu0
    %v1344 = vadd.f32 0.0, %v1343
    %1345 = vdwg.mxu0
    %v1347 = vsel %vm136, %v1325, 0
    %1349 = vmatpush.msra.mxu0 0.0
    %1350 = vmatpush.msra.mxu0 0.0
    %1351 = vmatpush.msra.mxu0 0.0
    %1352 = vmatpush.msra.mxu0 0.0
    %1353 = vmatpush.msra.mxu0 0.0
    %1354 = vmatpush.msra.mxu0 0.0
    %1355 = vmatpush.msra.mxu0 0.0
    %1356 = vmatpush.msra.mxu0 0.0
    %1357 = vmatpush.msra.mxu0 0.0
    %1358 = vmatpush.msra.mxu0 0.0
    %1359 = vmatpush.msra.mxu0 0.0
    %1360 = vmatpush.msra.mxu0 0.0
    %1361 = vmatpush.msra.mxu0 0.0
    %1362 = vmatpush.msra.mxu0 0.0
    %1363 = vmatpush.msra.mxu0 0.0
    %1364 = vmatpush.msra.mxu0 %v90
    %1365 = vmatmul.f32.gmra.mxu0 %v1347
    %v1366 = vpop.f32.mrf.mxu0
    %v1367 = vadd.f32 %v1344, %v1366
    %1368 = vdwg.mxu0
    %v1369 = vadd.f32 %v1367, %v161
    %v1370 = vxor.u32 %v1369, 2147483648
    %v1371 = vmul.f32 %v1370, 1.442695
    %v1372 = vpow.pop %v1371
    %v1373 = vadd.f32 %v1372, 1.0
    %v1374 = vrcp.pop %v1373
    %v1375 = vmul.f32 %v1373, %v1374
    %v1376 = vsub.f32 1.0, %v1375
    %v1377 = vmul.f32 %v1374, %v1376
    %v1378 = vadd.f32 %v1374, %v1377
    %vm1379 = vweird.f32 %v1373
    %vm1380 = vweird.f32 %v1374
    %vm1381 = vmor %vm1379, %vm1380
    %v1382 = vsel %vm1381, %v1374, %v1378
    %v1383 = vand.u32 2147483647, %v1373
    %vm1384 = vcmp.eq.f32.partialorder %v1383, 8.507059e+37
    %v1385 = vand.u32 %v1373, 2147483648
    %v1386 = vor.u32 1.1754944e-38, %v1385
    %v1387 = vsel %vm1384, %v1386, %v1382
    %v1388 = vmul.f32 1.0, %v1387
    %v1389 = vtanh.pop %v1369
    %v1390 = vmul.f32 %v1388, %v1229
    %1392 = vrot.lane.b32.xlu0 %v1389, 64
    %v1393 = vpop.permute.xlu0 %1392
    %v1395 = vmul.f32 %v1388, %v1393
    %1397 = vrot.lane.b32.xlu0 %v1395, 32
    %v1398 = vpop.permute.xlu0 %1397
    %v1400 = vadd.f32 %v1390, %v1398
    %v1401 = vtanh.pop %v1400
    %1403 = vrot.lane.b32.xlu0 %v1401, 64
    %v1404 = vpop.permute.xlu0 %1403
    %v1406 = vmul.f32 %v1388, %v1404
    %1408 = vrot.lane.b32.xlu0 %v1323, 32
    %v1409 = vpop.permute.xlu0 %1408
    %v1410 = vsel %vm112, %v1409, 0
    %1412 = vmatpush.msra.mxu0 0.0
    %1413 = vmatpush.msra.mxu0 0.0
    %1414 = vmatpush.msra.mxu0 0.0
    %1415 = vmatpush.msra.mxu0 0.0
    %1416 = vmatpush.msra.mxu0 0.0
    %1417 = vmatpush.msra.mxu0 0.0
    %1418 = vmatpush.msra.mxu0 0.0
    %1419 = vmatpush.msra.mxu0 0.0
    %1420 = vmatpush.msra.mxu0 0.0
    %1421 = vmatpush.msra.mxu0 0.0
    %1422 = vmatpush.msra.mxu0 0.0
    %1423 = vmatpush.msra.mxu0 0.0
    %1424 = vmatpush.msra.mxu0 %v102
    %1425 = vmatpush.msra.mxu0 %v101
    %1426 = vmatpush.msra.mxu0 %v100
    %1427 = vmatpush.msra.mxu0 %v99
    %1428 = vmatmul.f32.gmra.mxu0 %v1410
    %v1429 = vpop.f32.mrf.mxu0
    %v1430 = vadd.f32 0.0, %v1429
    %1431 = vdwg.mxu0
    %1433 = vrot.lane.b32.xlu0 %v1406, 32
    %v1434 = vpop.permute.xlu0 %1433
    %v1435 = vsel %vm112, %v1434, 0
    %1437 = vmatpush.msra.mxu0 0.0
    %1438 = vmatpush.msra.mxu0 0.0
    %1439 = vmatpush.msra.mxu0 0.0
    %1440 = vmatpush.msra.mxu0 0.0
    %1441 = vmatpush.msra.mxu0 0.0
    %1442 = vmatpush.msra.mxu0 0.0
    %1443 = vmatpush.msra.mxu0 0.0
    %1444 = vmatpush.msra.mxu0 0.0
    %1445 = vmatpush.msra.mxu0 0.0
    %1446 = vmatpush.msra.mxu0 0.0
    %1447 = vmatpush.msra.mxu0 0.0
    %1448 = vmatpush.msra.mxu0 0.0
    %1449 = vmatpush.msra.mxu0 %v94
    %1450 = vmatpush.msra.mxu0 %v93
    %1451 = vmatpush.msra.mxu0 %v92
    %1452 = vmatpush.msra.mxu0 %v91
    %1453 = vmatmul.f32.gmra.mxu0 %v1435
    %v1454 = vpop.f32.mrf.mxu0
    %v1455 = vadd.f32 %v1430, %v1454
    %1456 = vdwg.mxu0
    %v1457 = vadd.f32 %v1455, %v254
    %v1458 = vxor.u32 %v1457, 2147483648
    %v1459 = vmul.f32 %v1458, 1.442695
    %v1460 = vpow.pop %v1459
    %v1461 = vadd.f32 %v1460, 1.0
    %v1462 = vrcp.pop %v1461
    %v1463 = vmul.f32 %v1461, %v1462
    %v1464 = vsub.f32 1.0, %v1463
    %v1465 = vmul.f32 %v1462, %v1464
    %v1466 = vadd.f32 %v1462, %v1465
    %vm1467 = vweird.f32 %v1461
    %vm1468 = vweird.f32 %v1462
    %vm1469 = vmor %vm1467, %vm1468
    %v1470 = vsel %vm1469, %v1462, %v1466
    %v1471 = vand.u32 2147483647, %v1461
    %vm1472 = vcmp.eq.f32.partialorder %v1471, 8.507059e+37
    %v1473 = vand.u32 %v1461, 2147483648
    %v1474 = vor.u32 1.1754944e-38, %v1473
    %v1475 = vsel %vm1472, %v1474, %v1470
    %v1476 = vmul.f32 1.0, %v1475
    %v1477 = vtanh.pop %v1457
    %v1478 = vmul.f32 %v1476, %v1317
    %1480 = vrot.lane.b32.xlu0 %v1477, 64
    %v1481 = vpop.permute.xlu0 %1480
    %v1483 = vmul.f32 %v1476, %v1481
    %1485 = vrot.lane.b32.xlu0 %v1483, 32
    %v1486 = vpop.permute.xlu0 %1485
    %v1488 = vadd.f32 %v1478, %v1486
    %v1489 = vtanh.pop %v1488
    %1491 = vrot.lane.b32.xlu0 %v1489, 64
    %v1492 = vpop.permute.xlu0 %1491
    %v1494 = vmul.f32 %v1476, %v1492
    %v1495 = vrot.slane %v468, 6
    %v1497 = vrot.slane %v639, 4
    %v1499 = vrot.slane %v810, 2
    %v1501 = vrot.slane %v1152, 6
    %v1503 = vrot.slane %v1323, 4
    %v1506 = vrot.slane %v1494, 2
    %vm1508 = vcmask 1041408
    %v1509 = vsel %vm1508, %v297, %v1495
    %vm1510 = vcmask 1043456
    %v1511 = vsel %vm1510, %v1509, %v1497
    %vm1512 = vcmask 1045504
    %v1513 = vsel %vm1512, %v1511, %v1499
    %v1514 = vsel %vm1508, %v981, %v1501
    %v1515 = vsel %vm1510, %v1514, %v1503
    %v1516 = vsel %vm1512, %v1515, %v1506
    %v1517 = vld [vmem:[%s7] sm:$0xff]
    %v1518 = vld [vmem:[%s7 + $0x8] sm:$0xff]
    %v1519 = vld [vmem:[%s7 + $0x10] sm:$0xff]
    %v1520 = vld [vmem:[%s7 + $0x18] sm:$0xff]
    %v1521 = vld [vmem:[%s8] sm:$0x1]
    %v1523 = vperm.slane %v1521, 0
    %1527 = vrot.lane.b32.xlu0 %v1513, 32
    %v1528 = vpop.permute.xlu0 %1527
    %1529 = vrot.lane.b32.xlu0 %v1516, 32
    %v1530 = vpop.permute.xlu0 %1529
    %v1531 = vsel %vm112, %v1528, 0
    %v1533 = vsel %vm112, %v1530, 0
    %1535 = vmatpush.msra.mxu0 0.0
    %1536 = vmatpush.msra.mxu0 0.0
    %1537 = vmatpush.msra.mxu0 0.0
    %1538 = vmatpush.msra.mxu0 0.0
    %1539 = vmatpush.msra.mxu0 0.0
    %1540 = vmatpush.msra.mxu0 0.0
    %1541 = vmatpush.msra.mxu0 0.0
    %1542 = vmatpush.msra.mxu0 0.0
    %1543 = vmatpush.msra.mxu0 0.0
    %1544 = vmatpush.msra.mxu0 0.0
    %1545 = vmatpush.msra.mxu0 0.0
    %1546 = vmatpush.msra.mxu0 0.0
    %1547 = vmatpush.msra.mxu0 %v1520
    %1548 = vmatpush.msra.mxu0 %v1519
    %1549 = vmatpush.msra.mxu0 %v1518
    %1550 = vmatpush.msra.mxu0 %v1517
    %1551 = vmatmul.f32.gmra.mxu0 %v1531
    %v1552 = vpop.f32.mrf.mxu0
    %v1553 = vadd.f32 %v1523, %v1552
    %1554 = vmatmul.f32.gmra.mxu0 %v1533
    %v1555 = vpop.f32.mrf.mxu0
    %v1556 = vadd.f32 %v1523, %v1555
    %1557 = vdwg.mxu0
    %vm1558 = vcmask 31744
    %1559 = vst.msk [vmem:[%s11] sm:$0xff] %vm1558, %v1553
    %1560 = vst.msk [vmem:[%s11 + $0x8] sm:$0xff] %vm1558, %v1556
    %vm1562 = vcmask 254976
    %1563 = vst.msk [vmem:[#allocation8] sm:$0x3] %vm1562, %v1434
    %1565 = vrot.lane.b32.xlu0 %v1400, 96
    %v1566 = vpop.permute.xlu0 %1565
    %1568 = vst.msk [vmem:[#allocation9] sm:$0x3] %vm1562, %v1566
    %1569 = vrot.lane.b32.xlu0 %v1494, 32
    %v1570 = vpop.permute.xlu0 %1569
    %s1572 = scalar_lea.vmem [#allocation8], 2
    %1573 = vst.msk [vmem:[%s1572] sm:$0x3] %vm1562, %v1570
    %1575 = vrot.lane.b32.xlu0 %v1488, 96
    %v1576 = vpop.permute.xlu0 %1575
    %s1578 = scalar_lea.vmem [#allocation9], 2
    %1579 = vst.msk [vmem:[%s1578] sm:$0x3] %vm1562, %v1576
    // Predicated region
    $region58: #{_lambda_.1} parent=1 // pred_check
      _
    $region59: #{_lambda_.1} parent=1 // pred_check_branch
      %1581 = sbr.rel (0) target = $region61
    $region60: #{_lambda_.1} parent=1 // pred_region
      _
    $region61: #{_lambda_.1} parent=1 // pred_fallthru
      _
    // Predicated region
    $region62: #{_lambda_.1} parent=1 // pred_check
      _
    $region63: #{_lambda_.1} parent=1 // pred_check_branch
      %1583 = sbr.rel (0) target = $region65
    $region64: #{_lambda_.1} parent=1 // pred_region
      %1585 = vsyncadd [#allocation4], 0
      %s1586 = sshll.u32 [#allocation8], 4
      %s1587 = int_to_ptr.vmem [resolvable:$true] %s1586
      %s1588 = sshll.u32 %s12, 4
      %s1589 = int_to_ptr.hbm [resolvable:$true] %s1588
      %1594 = dma.vmem_to_hbm [thread:$0]  %s1587, 64, %s1589, [#allocation4], 32, 32, 2
    $region65: #{_lambda_.1} parent=1 // pred_fallthru
      _
    // Predicated region
    $region66: #{_lambda_.1} parent=1 // pred_check
      _
    $region67: #{_lambda_.1} parent=1 // pred_check_branch
      %1596 = sbr.rel (0) target = $region69
    $region68: #{_lambda_.1} parent=1 // pred_region
      %1598 = vsyncadd [#allocation10], 0
      %s1599 = sshll.u32 [#allocation9], 4
      %s1600 = int_to_ptr.vmem [resolvable:$true] %s1599
      %s1601 = sshll.u32 %s13, 4
      %s1602 = int_to_ptr.hbm [resolvable:$true] %s1601
      %1607 = dma.vmem_to_hbm [thread:$0]  %s1600, 64, %s1602, [#allocation10], 32, 32, 2
    $region69: #{_lambda_.1} parent=1 // pred_fallthru
      _
    // Predicated region
    $region70: #{_lambda_.1} parent=1 // pred_check
      _
    $region71: #{_lambda_.1} parent=1 // pred_check_branch
      %1609 = sbr.rel (0) target = $region73
    $region72: #{_lambda_.1} parent=1 // pred_region
      _
    $region73: #{_lambda_.1} parent=1 // pred_fallthru
      _
    // Predicated region
    $region74: #{_lambda_.1} parent=1 // pred_check
      _
    $region75: #{_lambda_.1} parent=1 // pred_check_branch
      %1611 = sbr.rel (0) target = $region77
    $region76: #{_lambda_.1} parent=1 // pred_region
      %1613 = dma.done [#allocation4], 64
    $region77: #{_lambda_.1} parent=1 // pred_fallthru
      _
    // Predicated region
    $region78: #{_lambda_.1} parent=1 // pred_check
      _
    $region79: #{_lambda_.1} parent=1 // pred_check_branch
      %1615 = sbr.rel (0) target = $region81
    $region80: #{_lambda_.1} parent=1 // pred_region
      %1617 = dma.done [#allocation10], 64
    $region81: #{_lambda_.1} parent=1 // pred_fallthru
      _
    %1618 = vsyncpa [#allocation3], 1
    %1619 = vsyncpa [#allocation6], 1
    %1620 = vsyncpa [#allocation4], 1
    %1621 = vsyncpa [#allocation10], 1

</llo_original>
